<compile_context>
chip_gen: v7x
topology: tpu7x:2x2x1
jax: 0.10.0
libtpu: 0.0.40
codegen_flags: <defaults>
</compile_context>

<pallas_src>
import functools

import jax
import jax.numpy as jnp
from jax.experimental import pallas as pl
from jax.experimental.pallas import tpu as pltpu

CP = 128                                  # lane-padded channel width (TPU lanes)


def _round_up(v, m):
    return ((v + m - 1) // m) * m


def _tpu_vmem_bytes():
    try:
        info = pltpu.get_tpu_info()
        cap = getattr(info, "vmem_capacity_bytes", None)
        if cap:
            return int(cap)
    except Exception:
        pass
    return 64 * 1024 * 1024               # conservative (v7x per-TC) fallback


_VMEM_PHYS = _tpu_vmem_bytes()
# Explicit scoped-VMEM budget: half the physical VMEM, capped at 64 MiB.
_VMEM_LIMIT = min(max(_VMEM_PHYS // 2, 16 * 1024 * 1024), 64 * 1024 * 1024)
# Bigger row tiles on 128-MiB parts (v5e/v6e), conservative on v7x (64 MiB).
_ROW_CAP = 1024 if _VMEM_PHYS >= 128 * 1024 * 1024 else 512


def _pad_last(x, target=CP):
    c = x.shape[-1]
    if c == target:
        return x
    pad = [(0, 0)] * (x.ndim - 1) + [(0, target - c)]
    return jnp.pad(x, pad)


def _grid_params(sem=("parallel",)):
    return pltpu.CompilerParams(dimension_semantics=sem,
                                vmem_limit_bytes=_VMEM_LIMIT)


# ----------------------------------------------------------------------------
# Pallas kernels
# ----------------------------------------------------------------------------

def _silu(y):
    # y * sigmoid(y). exp rides the EUP, approx reciprocal too; -y is clamped
    # so exp cannot overflow to inf and poison the approx reciprocal.
    e = jnp.exp(jnp.minimum(-y, 80.0))
    return y * pl.reciprocal(1.0 + e, approx=True)


def _conv_bn_act_kernel(x_ref, w_ref, sc_ref, sh_ref, conv_ref, bn_ref, act_ref):
    """One bf16 MXU matmul (im2col / 1x1 conv) + folded-BN affine + SiLU.
    All three intermediates the reference appends are emitted (bf16)."""
    y = jnp.dot(x_ref[...], w_ref[...], preferred_element_type=jnp.float32)
    conv_ref[...] = y.astype(conv_ref.dtype)
    bn = y * sc_ref[...] + sh_ref[...]
    bn_ref[...] = bn.astype(bn_ref.dtype)
    act_ref[...] = _silu(bn).astype(act_ref.dtype)


def _mbconv_kernel(x_ref, dww_ref, dsc_ref, dsh_ref,
                   pww_ref, psc_ref, psh_ref, out_ref):
    """Fused MBConv-lite: depthwise 3x3 as an im2col matmul (block-expanded
    weight) + BN + SiLU + 1x1 projection (bf16 MXU) + BN -> one bf16 output."""
    y = jnp.dot(x_ref[...], dww_ref[...], preferred_element_type=jnp.float32)
    y = _silu(y * dsc_ref[...] + dsh_ref[...])
    z = jnp.dot(y.astype(jnp.bfloat16), pww_ref[...],
                preferred_element_type=jnp.float32)
    out_ref[...] = (z * psc_ref[...] + psh_ref[...]).astype(out_ref.dtype)


def _pool_fc_kernel(inv_hw, x_ref, w_ref, b_ref, pool_ref, logit_ref):
    """global average pool (reduction grid over HW tiles, accumulate into the
    resident pool output) + classifier matmul fused on the last step."""
    @pl.when(pl.program_id(0) == 0)
    def _():
        pool_ref[...] = jnp.zeros_like(pool_ref)

    pool_ref[...] += jnp.sum(x_ref[...].astype(jnp.float32), axis=1)

    @pl.when(pl.program_id(0) == pl.num_programs(0) - 1)
    def _():
        pooled = pool_ref[...] * inv_hw
        pool_ref[...] = pooled
        logit_ref[...] = jnp.dot(pooled.astype(jnp.bfloat16), w_ref[...],
                                 preferred_element_type=jnp.float32) + b_ref[...]


# ----------------------------------------------------------------------------
# Wrappers: im2col construction (layout glue) + pallas_call plumbing
# ----------------------------------------------------------------------------

def _im2col_3x3(x, stride):
    """(N,H,W,C) -> row-major patches (N*ho*wo, 9*C) for a 3x3 / pad=1 conv.
    Tap ordering is (ki*3+kj)*C + c, matching HWIO weight flattening."""
    n, h, w, c = x.shape
    ho = (h + 2 - 3) // stride + 1
    wo = (w + 2 - 3) // stride + 1
    xp = jnp.pad(x, ((0, 0), (1, 1), (1, 1), (0, 0)))
    cols = []
    for ki in range(3):
        for kj in range(3):
            cols.append(xp[:, ki:ki + stride * (ho - 1) + 1:stride,
                              kj:kj + stride * (wo - 1) + 1:stride, :])
    patches = jnp.concatenate(cols, axis=-1)            # (N, ho, wo, 9*C)
    return patches.reshape(n * ho * wo, 9 * c), ho, wo


def _run_conv_bn_act(src_bf16, w_pad_bf16, scale, shift):
    """Row-tiled launch of _conv_bn_act_kernel. src: (M, K_pad) bf16."""
    m, k_pad = src_bf16.shape
    tm = min(_ROW_CAP, _round_up(m, 8))
    m_pad = _round_up(m, tm)
    x = jnp.pad(src_bf16, ((0, m_pad - m), (0, 0)))
    outs = pl.pallas_call(
        _conv_bn_act_kernel,
        out_shape=tuple(jax.ShapeDtypeStruct((m_pad, CP), jnp.bfloat16)
                        for _ in range(3)),
        grid=(m_pad // tm,),
        in_specs=[pl.BlockSpec((tm, k_pad), lambda i: (i, 0)),
                  pl.BlockSpec((k_pad, CP), lambda i: (0, 0)),
                  pl.BlockSpec((1, CP), lambda i: (0, 0)),
                  pl.BlockSpec((1, CP), lambda i: (0, 0))],
        out_specs=tuple(pl.BlockSpec((tm, CP), lambda i: (i, 0))
                        for _ in range(3)),
        compiler_params=_grid_params(),
    )(x, w_pad_bf16, scale, shift)
    return tuple(o[:m] for o in outs)


def fused_stem(x_nhwc, w_hwio, bn_scale, bn_shift):
    """conv_stem 3x3/s2 (+BN +SiLU): im2col packed into the lane dim ->
    one aligned matmul per row tile."""
    n, h, w, cin = x_nhwc.shape
    cout = w_hwio.shape[-1]
    patches, ho, wo = _im2col_3x3(x_nhwc.astype(jnp.float32), stride=2)
    k = 9 * cin
    k_pad = _round_up(k, CP)
    src = jnp.pad(patches, ((0, 0), (0, k_pad - k))).astype(jnp.bfloat16)
    w2 = jnp.pad(w_hwio.reshape(k, cout),
                 ((0, k_pad - k), (0, CP - cout))).astype(jnp.bfloat16)
    sc = _pad_last(bn_scale.reshape(1, -1))
    sh = _pad_last(bn_shift.reshape(1, -1))
    conv, bn, act = _run_conv_bn_act(src, w2, sc, sh)
    rs = lambda y: y.reshape(n, ho, wo, CP)
    return rs(conv), rs(bn), rs(act)


def fused_mbconv(x_cp, blk):
    """Fused MBConv-lite block. x_cp: (N,H,W,CP) bf16, real channels first."""
    n, h, w, _ = x_cp.shape
    cin = blk['dw_w'].shape[-1]
    cout = blk['pw_w'].shape[-1]
    stride = blk['stride']
    patches, ho, wo = _im2col_3x3(x_cp[..., :cin], stride)     # bf16 patches
    k = 9 * cin
    k_pad = _round_up(k, CP)                                   # 128 or 256
    src = jnp.pad(patches, ((0, 0), (0, k_pad - k)))

    # Depthwise weight expanded to a (9*cin, cin) block-diagonal matrix so the
    # dw conv is a single MXU matmul on the packed im2col source.
    dw = blk['dw_w'].reshape(9, cin)
    dw_mat = (dw[:, :, None] * jnp.eye(cin, dtype=dw.dtype)[None]).reshape(k, cin)
    dw_mat = jnp.pad(dw_mat, ((0, k_pad - k), (0, CP - cin))).astype(jnp.bfloat16)
    dsc = _pad_last(blk['dw_scale'].reshape(1, -1))
    dsh = _pad_last(blk['dw_shift'].reshape(1, -1))
    pww = jnp.pad(blk['pw_w'], ((0, CP - cin), (0, CP - cout))).astype(jnp.bfloat16)
    psc = _pad_last(blk['pw_scale'].reshape(1, -1))
    psh = _pad_last(blk['pw_shift'].reshape(1, -1))

    m = src.shape[0]
    tm = min(_ROW_CAP, _round_up(m, 8))
    m_pad = _round_up(m, tm)
    src = jnp.pad(src, ((0, m_pad - m), (0, 0)))
    out = pl.pallas_call(
        _mbconv_kernel,
        out_shape=jax.ShapeDtypeStruct((m_pad, CP), jnp.bfloat16),
        grid=(m_pad // tm,),
        in_specs=[pl.BlockSpec((tm, k_pad), lambda i: (i, 0)),
                  pl.BlockSpec((k_pad, CP), lambda i: (0, 0)),
                  pl.BlockSpec((1, CP), lambda i: (0, 0)),
                  pl.BlockSpec((1, CP), lambda i: (0, 0)),
                  pl.BlockSpec((CP, CP), lambda i: (0, 0)),
                  pl.BlockSpec((1, CP), lambda i: (0, 0)),
                  pl.BlockSpec((1, CP), lambda i: (0, 0))],
        out_specs=pl.BlockSpec((tm, CP), lambda i: (i, 0)),
        compiler_params=_grid_params(),
    )(src, dw_mat, dsc, dsh, pww, psc, psh)
    return out[:m].reshape(n, ho, wo, CP)


def fused_head(x_cp, w_1x1, bn_scale, bn_shift):
    """conv_head 1x1 (+BN +SiLU); x_cp: (N,H,W,CP) bf16."""
    n, h, w, _ = x_cp.shape
    cin, cout = w_1x1.shape[-2], w_1x1.shape[-1]
    src = x_cp.reshape(n * h * w, CP)
    w2 = jnp.pad(w_1x1.reshape(cin, cout),
                 ((0, CP - cin), (0, CP - cout))).astype(jnp.bfloat16)
    sc = _pad_last(bn_scale.reshape(1, -1))
    sh = _pad_last(bn_shift.reshape(1, -1))
    conv, bn, act = _run_conv_bn_act(src, w2, sc, sh)
    rs = lambda y: y.reshape(n, h, w, CP)
    return rs(conv), rs(bn), rs(act)


def fused_pool_fc(act_cp, fc_w, fc_b):
    """global_pool + classifier, reduction grid over HW tiles."""
    n, h, w, _ = act_cp.shape
    hw = h * w
    cin, ncls = fc_w.shape
    thw = min(512, _round_up(hw, 8))
    hw_pad = _round_up(hw, thw)
    x3 = jnp.pad(act_cp.reshape(n, hw, CP), ((0, 0), (0, hw_pad - hw), (0, 0)))
    w2 = jnp.pad(fc_w, ((0, CP - cin), (0, CP - ncls))).astype(jnp.bfloat16)
    b2 = _pad_last(fc_b.reshape(1, -1))
    return pl.pallas_call(
        functools.partial(_pool_fc_kernel, 1.0 / hw),
        out_shape=(jax.ShapeDtypeStruct((n, CP), jnp.float32),
                   jax.ShapeDtypeStruct((n, CP), jnp.float32)),
        grid=(hw_pad // thw,),
        in_specs=[pl.BlockSpec((n, thw, CP), lambda i: (0, i, 0)),
                  pl.BlockSpec((CP, CP), lambda i: (0, 0)),
                  pl.BlockSpec((1, CP), lambda i: (0, 0))],
        out_specs=(pl.BlockSpec((n, CP), lambda i: (0, 0)),
                   pl.BlockSpec((n, CP), lambda i: (0, 0))),
        compiler_params=_grid_params(sem=("arbitrary",)),
    )(x3, w2, b2)


# ----------------------------------------------------------------------------
# Synthetic EfficientNet-style backbone: params + forward
# ----------------------------------------------------------------------------

def _bn_fold(key, c, eps=1e-5):
    k1, k2, k3, k4 = jax.random.split(key, 4)
    gamma = 1.0 + 0.1 * jax.random.normal(k1, (c,), jnp.float32)
    beta = 0.1 * jax.random.normal(k2, (c,), jnp.float32)
    mean = 0.1 * jax.random.normal(k3, (c,), jnp.float32)
    var = 1.0 + 0.1 * jax.random.uniform(k4, (c,), jnp.float32)
    scale = gamma / jnp.sqrt(var + eps)
    shift = beta - mean * scale
    return scale, shift


def build_params(key, cin=4, stem_c=8,
                 block_cfg=((8, 16, 1), (16, 24, 2), (24, 32, 1)),
                 head_c=64, num_classes=10):
    keys = iter(jax.random.split(key, 64))
    p = {}
    p['stem_w'] = 0.1 * jax.random.normal(next(keys), (3, 3, cin, stem_c), jnp.float32)
    p['bn1_scale'], p['bn1_shift'] = _bn_fold(next(keys), stem_c)
    blocks = []
    for (bc_in, bc_out, stride) in block_cfg:
        blk = {
            'stride': stride,
            'dw_w': 0.1 * jax.random.normal(next(keys), (3, 3, bc_in), jnp.float32),
            'pw_w': 0.1 * jax.random.normal(next(keys), (bc_in, bc_out), jnp.float32),
        }
        blk['dw_scale'], blk['dw_shift'] = _bn_fold(next(keys), bc_in)
        blk['pw_scale'], blk['pw_shift'] = _bn_fold(next(keys), bc_out)
        blocks.append(blk)
    p['blocks'] = blocks
    last_c = block_cfg[-1][1]
    p['head_w'] = 0.1 * jax.random.normal(next(keys), (1, 1, last_c, head_c), jnp.float32)
    p['bn2_scale'], p['bn2_shift'] = _bn_fold(next(keys), head_c)
    p['fc_w'] = 0.1 * jax.random.normal(next(keys), (head_c, num_classes), jnp.float32)
    p['fc_b'] = 0.1 * jax.random.normal(next(keys), (num_classes,), jnp.float32)
    return p


def efficient_encoder_forward(params, x_nchw, nchw_features=True):
    """Mirrors EfficientEncoder.forward: returns [x, conv_stem, bn1, act1,
    block0, block1, block2, conv_head, bn2, act2, global_pool, classifier].

    Compute stays NHWC with 128-lane-padded channels and bf16 feature streams;
    features are sliced back to real channels, upcast to f32 and (optionally)
    transposed to NCHW only when emitted.
    """
    def emit(y_cp, c_real):
        y = y_cp[..., :c_real].astype(jnp.float32)
        return jnp.transpose(y, (0, 3, 1, 2)) if nchw_features else y

    features = [x_nchw]
    x = jnp.transpose(x_nchw.astype(jnp.float32), (0, 2, 3, 1))   # NCHW -> NHWC

    stem_c = params['stem_w'].shape[-1]
    conv, bn, act = fused_stem(x, params['stem_w'],
                               params['bn1_scale'], params['bn1_shift'])
    features += [emit(conv, stem_c), emit(bn, stem_c), emit(act, stem_c)]

    cur = act                                                     # (N,H,W,CP) bf16
    for blk in params['blocks']:
        cur = fused_mbconv(cur, blk)
        features.append(emit(cur, blk['pw_w'].shape[-1]))

    head_c = params['head_w'].shape[-1]
    convh, bn2, act2 = fused_head(cur, params['head_w'],
                                  params['bn2_scale'], params['bn2_shift'])
    features += [emit(convh, head_c), emit(bn2, head_c), emit(act2, head_c)]

    pooled, logits = fused_pool_fc(act2, params['fc_w'], params['fc_b'])
    features.append(pooled[:, :head_c])
    features.append(logits[:, :params['fc_w'].shape[1]])
    return features


# ----------------------------------------------------------------------------
# Pure-JAX reference (for numerical validation of the fused kernels)
# ----------------------------------------------------------------------------

def _reference_forward(params, x_nchw):
    x = jnp.transpose(x_nchw.astype(jnp.float32), (0, 2, 3, 1))

    def conv(x, w, stride, pad):
        return jax.lax.conv_general_dilated(
            x, w, (stride, stride), [(pad, pad), (pad, pad)],
            dimension_numbers=('NHWC', 'HWIO', 'NHWC'))

    feats = [x_nchw]
    y = conv(x, params['stem_w'], 2, 1); feats.append(y)
    y = y * params['bn1_scale'] + params['bn1_shift']; feats.append(y)
    y = y * jax.nn.sigmoid(y); feats.append(y)
    for blk in params['blocks']:
        c = blk['dw_w'].shape[-1]
        z = jax.lax.conv_general_dilated(
            y, blk['dw_w'].reshape(3, 3, 1, c), (blk['stride'],) * 2,
            [(1, 1), (1, 1)], dimension_numbers=('NHWC', 'HWIO', 'NHWC'),
            feature_group_count=c)
        z = z * blk['dw_scale'] + blk['dw_shift']
        z = z * jax.nn.sigmoid(z)
        y = jnp.einsum('nhwc,cd->nhwd', z, blk['pw_w'])
        y = y * blk['pw_scale'] + blk['pw_shift']
        feats.append(y)
    y = conv(y, params['head_w'], 1, 0); feats.append(y)
    y = y * params['bn2_scale'] + params['bn2_shift']; feats.append(y)
    y = y * jax.nn.sigmoid(y); feats.append(y)
    p = jnp.mean(y, axis=(1, 2)); feats.append(p)
    feats.append(p @ params['fc_w'] + params['fc_b'])
    return ([feats[0]]
            + [jnp.transpose(f, (0, 3, 1, 2)) for f in feats[1:10]]
            + feats[10:])


# ----------------------------------------------------------------------------

if __name__ == "__main__":
    key = jax.random.PRNGKey(0)
    kx, kp = jax.random.split(key)
    x = jax.random.normal(kx, (2, 4, 16, 16), jnp.float32)   # NCHW, like PyTorch
    params = build_params(kp, cin=4)

    fwd = jax.jit(lambda xx: efficient_encoder_forward(params, xx))
    feats = jax.block_until_ready(fwd(x))

    # shape / finiteness checks
    assert feats[0].shape == (2, 4, 16, 16)
    assert feats[1].shape == (2, 8, 8, 8)          # conv_stem
    assert feats[4].shape == (2, 16, 8, 8)         # block0
    assert feats[5].shape == (2, 24, 4, 4)         # block1
    assert feats[6].shape == (2, 32, 4, 4)         # block2
    assert feats[7].shape == (2, 64, 4, 4)         # conv_head
    assert feats[-2].shape == (2, 64)              # global_pool
    assert feats[-1].shape == (2, 10)              # classifier
    assert all(bool(jnp.all(jnp.isfinite(f))) for f in feats)

    # numerical check vs. a pure-JAX f32 reference (tolerance covers bf16 MXU
    # operands, bf16 feature streams and the approx-reciprocal sigmoid)
    ref = _reference_forward(params, x)
    for i, (a, b) in enumerate(zip(feats, ref)):
        assert a.shape == b.shape, (i, a.shape, b.shape)
        err = float(jnp.max(jnp.abs(a - b)))
        assert bool(jnp.allclose(a, b, rtol=5e-2, atol=5e-2)), \
            f"feature {i} mismatch (max abs err {err})"

    print("KERNEL_OK")
</pallas_src>

<mosaic_0001>
module attributes {stable_mosaic.version = 11 : i64} {
  func.func @_conv_bn_act_kernel(%arg0: i32, %arg1: memref<128x128xbf16, #tpu.memory_space<vmem>>, %arg2: memref<128x128xbf16, #tpu.memory_space<vmem>>, %arg3: memref<1x128xf32, #tpu.memory_space<vmem>>, %arg4: memref<1x128xf32, #tpu.memory_space<vmem>>, %arg5: memref<128x128xbf16, #tpu.memory_space<vmem>>, %arg6: memref<128x128xbf16, #tpu.memory_space<vmem>>, %arg7: memref<128x128xbf16, #tpu.memory_space<vmem>>) attributes {dimension_semantics = [#tpu.dimension_semantics<parallel>], iteration_bounds = array<i64: 1>, scalar_prefetch = 0 : i64, scratch_operands = 0 : i64, tpu.core_type = #tpu.core_type<tc>, window_params = [{transform_indices = @transform_0, window_bounds = array<i64: 128, 128>}, {pipeline_mode = #tpu.pipeline_mode<synchronous>, transform_indices = @transform_1, window_bounds = array<i64: 128, 128>}, {pipeline_mode = #tpu.pipeline_mode<synchronous>, transform_indices = @transform_2, window_bounds = array<i64: 1, 128>}, {pipeline_mode = #tpu.pipeline_mode<synchronous>, transform_indices = @transform_3, window_bounds = array<i64: 1, 128>}, {transform_indices = @transform_4, window_bounds = array<i64: 128, 128>}, {transform_indices = @transform_5, window_bounds = array<i64: 128, 128>}, {transform_indices = @transform_6, window_bounds = array<i64: 128, 128>}]} {
    %c0 = arith.constant 0 : index
    %c0_0 = arith.constant 0 : index
    %0 = vector.load %arg1[%c0, %c0_0] : memref<128x128xbf16, #tpu.memory_space<vmem>>, vector<128x128xbf16>
    %c0_1 = arith.constant 0 : index
    %c0_2 = arith.constant 0 : index
    %1 = vector.load %arg2[%c0_1, %c0_2] : memref<128x128xbf16, #tpu.memory_space<vmem>>, vector<128x128xbf16>
    %cst = arith.constant dense<0.000000e+00> : vector<128x128xf32>
    %2 = tpu.matmul %0, %1, %cst {dimension_numbers = #tpu.dot_dimension_numbers<[1], [0], [0], [1], [0, 0, 1, 1], [], []>} : vector<128x128xbf16>, vector<128x128xbf16>, vector<128x128xf32> -> vector<128x128xf32>
    %3 = arith.truncf %2 : vector<128x128xf32> to vector<128x128xbf16>
    %c0_3 = arith.constant 0 : index
    %c0_4 = arith.constant 0 : index
    %4 = vector.load %arg5[%c0_3, %c0_4] : memref<128x128xbf16, #tpu.memory_space<vmem>>, vector<128x128xbf16>
    tpu.vector_store %arg5[%c0_3, %c0_4], %3 {strides = array<i32>} : memref<128x128xbf16, #tpu.memory_space<vmem>>, vector<128x128xbf16>,
    %c0_5 = arith.constant 0 : index
    %c0_6 = arith.constant 0 : index
    %5 = vector.load %arg3[%c0_5, %c0_6] : memref<1x128xf32, #tpu.memory_space<vmem>>, vector<1x128xf32>
    %6 = vector.broadcast %5 : vector<1x128xf32> to vector<128x128xf32>
    %7 = arith.mulf %2, %6 : vector<128x128xf32>
    %c0_7 = arith.constant 0 : index
    %c0_8 = arith.constant 0 : index
    %8 = vector.load %arg4[%c0_7, %c0_8] : memref<1x128xf32, #tpu.memory_space<vmem>>, vector<1x128xf32>
    %9 = vector.broadcast %8 : vector<1x128xf32> to vector<128x128xf32>
    %10 = arith.addf %7, %9 : vector<128x128xf32>
    %11 = arith.truncf %10 : vector<128x128xf32> to vector<128x128xbf16>
    %c0_9 = arith.constant 0 : index
    %c0_10 = arith.constant 0 : index
    %12 = vector.load %arg6[%c0_9, %c0_10] : memref<128x128xbf16, #tpu.memory_space<vmem>>, vector<128x128xbf16>
    tpu.vector_store %arg6[%c0_9, %c0_10], %11 {strides = array<i32>} : memref<128x128xbf16, #tpu.memory_space<vmem>>, vector<128x128xbf16>,
    %cst_11 = arith.constant 0.000000e+00 : f32
    %13 = vector.broadcast %cst_11 : f32 to vector<128x128xf32>
    %14 = arith.subf %13, %10 : vector<128x128xf32>
    %cst_12 = arith.constant 8.000000e+01 : f32
    %15 = vector.broadcast %cst_12 : f32 to vector<128x128xf32>
    %16 = arith.minimumf %14, %15 : vector<128x128xf32>
    %17 = math.exp %16 : vector<128x128xf32>
    %cst_13 = arith.constant 1.000000e+00 : f32
    %18 = vector.broadcast %cst_13 : f32 to vector<128x128xf32>
    %19 = arith.addf %18, %17 : vector<128x128xf32>
    %20 = tpu.reciprocal %19 {approx = true} : vector<128x128xf32> -> vector<128x128xf32>
    %21 = arith.mulf %10, %20 : vector<128x128xf32>
    %22 = arith.truncf %21 : vector<128x128xf32> to vector<128x128xbf16>
    %c0_14 = arith.constant 0 : index
    %c0_15 = arith.constant 0 : index
    %23 = vector.load %arg7[%c0_14, %c0_15] : memref<128x128xbf16, #tpu.memory_space<vmem>>, vector<128x128xbf16>
    tpu.vector_store %arg7[%c0_14, %c0_15], %22 {strides = array<i32>} : memref<128x128xbf16, #tpu.memory_space<vmem>>, vector<128x128xbf16>,
    return
  }
  func.func @transform_0(%arg0: i32) -> (i32, i32) {
    %c0_i32 = arith.constant 0 : i32
    %c0_i32_0 = arith.constant 0 : i32
    return %arg0, %c0_i32 : i32, i32
  }
  func.func @transform_1(%arg0: i32) -> (i32, i32) {
    %c0_i32 = arith.constant 0 : i32
    %c0_i32_0 = arith.constant 0 : i32
    %c0_i32_1 = arith.constant 0 : i32
    return %c0_i32, %c0_i32_0 : i32, i32
  }
  func.func @transform_2(%arg0: i32) -> (i32, i32) {
    %c0_i32 = arith.constant 0 : i32
    %c0_i32_0 = arith.constant 0 : i32
    %c0_i32_1 = arith.constant 0 : i32
    return %c0_i32, %c0_i32_0 : i32, i32
  }
  func.func @transform_3(%arg0: i32) -> (i32, i32) {
    %c0_i32 = arith.constant 0 : i32
    %c0_i32_0 = arith.constant 0 : i32
    %c0_i32_1 = arith.constant 0 : i32
    return %c0_i32, %c0_i32_0 : i32, i32
  }
  func.func @transform_4(%arg0: i32) -> (i32, i32) {
    %c0_i32 = arith.constant 0 : i32
    %c0_i32_0 = arith.constant 0 : i32
    return %arg0, %c0_i32 : i32, i32
  }
  func.func @transform_5(%arg0: i32) -> (i32, i32) {
    %c0_i32 = arith.constant 0 : i32
    %c0_i32_0 = arith.constant 0 : i32
    return %arg0, %c0_i32 : i32, i32
  }
  func.func @transform_6(%arg0: i32) -> (i32, i32) {
    %c0_i32 = arith.constant 0 : i32
    %c0_i32_0 = arith.constant 0 : i32
    return %arg0, %c0_i32 : i32, i32
  }
}

module attributes {stable_mosaic.version = 11 : i64} {
  func.func @_mbconv_kernel(%arg0: i32, %arg1: memref<128x128xbf16, #tpu.memory_space<vmem>>, %arg2: memref<128x128xbf16, #tpu.memory_space<vmem>>, %arg3: memref<1x128xf32, #tpu.memory_space<vmem>>, %arg4: memref<1x128xf32, #tpu.memory_space<vmem>>, %arg5: memref<128x128xbf16, #tpu.memory_space<vmem>>, %arg6: memref<1x128xf32, #tpu.memory_space<vmem>>, %arg7: memref<1x128xf32, #tpu.memory_space<vmem>>, %arg8: memref<128x128xbf16, #tpu.memory_space<vmem>>) attributes {dimension_semantics = [#tpu.dimension_semantics<parallel>], iteration_bounds = array<i64: 1>, scalar_prefetch = 0 : i64, scratch_operands = 0 : i64, tpu.core_type = #tpu.core_type<tc>, window_params = [{transform_indices = @transform_0, window_bounds = array<i64: 128, 128>}, {pipeline_mode = #tpu.pipeline_mode<synchronous>, transform_indices = @transform_1, window_bounds = array<i64: 128, 128>}, {pipeline_mode = #tpu.pipeline_mode<synchronous>, transform_indices = @transform_2, window_bounds = array<i64: 1, 128>}, {pipeline_mode = #tpu.pipeline_mode<synchronous>, transform_indices = @transform_3, window_bounds = array<i64: 1, 128>}, {pipeline_mode = #tpu.pipeline_mode<synchronous>, transform_indices = @transform_4, window_bounds = array<i64: 128, 128>}, {pipeline_mode = #tpu.pipeline_mode<synchronous>, transform_indices = @transform_5, window_bounds = array<i64: 1, 128>}, {pipeline_mode = #tpu.pipeline_mode<synchronous>, transform_indices = @transform_6, window_bounds = array<i64: 1, 128>}, {transform_indices = @transform_7, window_bounds = array<i64: 128, 128>}]} {
    %c0 = arith.constant 0 : index
    %c0_0 = arith.constant 0 : index
    %0 = vector.load %arg1[%c0, %c0_0] : memref<128x128xbf16, #tpu.memory_space<vmem>>, vector<128x128xbf16>
    %c0_1 = arith.constant 0 : index
    %c0_2 = arith.constant 0 : index
    %1 = vector.load %arg2[%c0_1, %c0_2] : memref<128x128xbf16, #tpu.memory_space<vmem>>, vector<128x128xbf16>
    %cst = arith.constant dense<0.000000e+00> : vector<128x128xf32>
    %2 = tpu.matmul %0, %1, %cst {dimension_numbers = #tpu.dot_dimension_numbers<[1], [0], [0], [1], [0, 0, 1, 1], [], []>} : vector<128x128xbf16>, vector<128x128xbf16>, vector<128x128xf32> -> vector<128x128xf32>
    %c0_3 = arith.constant 0 : index
    %c0_4 = arith.constant 0 : index
    %3 = vector.load %arg3[%c0_3, %c0_4] : memref<1x128xf32, #tpu.memory_space<vmem>>, vector<1x128xf32>
    %4 = vector.broadcast %3 : vector<1x128xf32> to vector<128x128xf32>
    %5 = arith.mulf %2, %4 : vector<128x128xf32>
    %c0_5 = arith.constant 0 : index
    %c0_6 = arith.constant 0 : index
    %6 = vector.load %arg4[%c0_5, %c0_6] : memref<1x128xf32, #tpu.memory_space<vmem>>, vector<1x128xf32>
    %7 = vector.broadcast %6 : vector<1x128xf32> to vector<128x128xf32>
    %8 = arith.addf %5, %7 : vector<128x128xf32>
    %cst_7 = arith.constant 0.000000e+00 : f32
    %9 = vector.broadcast %cst_7 : f32 to vector<128x128xf32>
    %10 = arith.subf %9, %8 : vector<128x128xf32>
    %cst_8 = arith.constant 8.000000e+01 : f32
    %11 = vector.broadcast %cst_8 : f32 to vector<128x128xf32>
    %12 = arith.minimumf %10, %11 : vector<128x128xf32>
    %13 = math.exp %12 : vector<128x128xf32>
    %cst_9 = arith.constant 1.000000e+00 : f32
    %14 = vector.broadcast %cst_9 : f32 to vector<128x128xf32>
    %15 = arith.addf %14, %13 : vector<128x128xf32>
    %16 = tpu.reciprocal %15 {approx = true} : vector<128x128xf32> -> vector<128x128xf32>
    %17 = arith.mulf %8, %16 : vector<128x128xf32>
    %18 = arith.truncf %17 : vector<128x128xf32> to vector<128x128xbf16>
    %c0_10 = arith.constant 0 : index
    %c0_11 = arith.constant 0 : index
    %19 = vector.load %arg5[%c0_10, %c0_11] : memref<128x128xbf16, #tpu.memory_space<vmem>>, vector<128x128xbf16>
    %cst_12 = arith.constant dense<0.000000e+00> : vector<128x128xf32>
    %20 = tpu.matmul %18, %19, %cst_12 {dimension_numbers = #tpu.dot_dimension_numbers<[1], [0], [0], [1], [0, 0, 1, 1], [], []>} : vector<128x128xbf16>, vector<128x128xbf16>, vector<128x128xf32> -> vector<128x128xf32>
    %c0_13 = arith.constant 0 : index
    %c0_14 = arith.constant 0 : index
    %21 = vector.load %arg6[%c0_13, %c0_14] : memref<1x128xf32, #tpu.memory_space<vmem>>, vector<1x128xf32>
    %22 = vector.broadcast %21 : vector<1x128xf32> to vector<128x128xf32>
    %23 = arith.mulf %20, %22 : vector<128x128xf32>
    %c0_15 = arith.constant 0 : index
    %c0_16 = arith.constant 0 : index
    %24 = vector.load %arg7[%c0_15, %c0_16] : memref<1x128xf32, #tpu.memory_space<vmem>>, vector<1x128xf32>
    %25 = vector.broadcast %24 : vector<1x128xf32> to vector<128x128xf32>
    %26 = arith.addf %23, %25 : vector<128x128xf32>
    %27 = arith.truncf %26 : vector<128x128xf32> to vector<128x128xbf16>
    %c0_17 = arith.constant 0 : index
    %c0_18 = arith.constant 0 : index
    %28 = vector.load %arg8[%c0_17, %c0_18] : memref<128x128xbf16, #tpu.memory_space<vmem>>, vector<128x128xbf16>
    tpu.vector_store %arg8[%c0_17, %c0_18], %27 {strides = array<i32>} : memref<128x128xbf16, #tpu.memory_space<vmem>>, vector<128x128xbf16>,
    return
  }
  func.func @transform_0(%arg0: i32) -> (i32, i32) {
    %c0_i32 = arith.constant 0 : i32
    %c0_i32_0 = arith.constant 0 : i32
    return %arg0, %c0_i32 : i32, i32
  }
  func.func @transform_1(%arg0: i32) -> (i32, i32) {
    %c0_i32 = arith.constant 0 : i32
    %c0_i32_0 = arith.constant 0 : i32
    %c0_i32_1 = arith.constant 0 : i32
    return %c0_i32, %c0_i32_0 : i32, i32
  }
  func.func @transform_2(%arg0: i32) -> (i32, i32) {
    %c0_i32 = arith.constant 0 : i32
    %c0_i32_0 = arith.constant 0 : i32
    %c0_i32_1 = arith.constant 0 : i32
    return %c0_i32, %c0_i32_0 : i32, i32
  }
  func.func @transform_3(%arg0: i32) -> (i32, i32) {
    %c0_i32 = arith.constant 0 : i32
    %c0_i32_0 = arith.constant 0 : i32
    %c0_i32_1 = arith.constant 0 : i32
    return %c0_i32, %c0_i32_0 : i32, i32
  }
  func.func @transform_4(%arg0: i32) -> (i32, i32) {
    %c0_i32 = arith.constant 0 : i32
    %c0_i32_0 = arith.constant 0 : i32
    %c0_i32_1 = arith.constant 0 : i32
    return %c0_i32, %c0_i32_0 : i32, i32
  }
  func.func @transform_5(%arg0: i32) -> (i32, i32) {
    %c0_i32 = arith.constant 0 : i32
    %c0_i32_0 = arith.constant 0 : i32
    %c0_i32_1 = arith.constant 0 : i32
    return %c0_i32, %c0_i32_0 : i32, i32
  }
  func.func @transform_6(%arg0: i32) -> (i32, i32) {
    %c0_i32 = arith.constant 0 : i32
    %c0_i32_0 = arith.constant 0 : i32
    %c0_i32_1 = arith.constant 0 : i32
    return %c0_i32, %c0_i32_0 : i32, i32
  }
  func.func @transform_7(%arg0: i32) -> (i32, i32) {
    %c0_i32 = arith.constant 0 : i32
    %c0_i32_0 = arith.constant 0 : i32
    return %arg0, %c0_i32 : i32, i32
  }
}

module attributes {stable_mosaic.version = 11 : i64} {
  func.func @_mbconv_kernel(%arg0: i32, %arg1: memref<32x256xbf16, #tpu.memory_space<vmem>>, %arg2: memref<256x128xbf16, #tpu.memory_space<vmem>>, %arg3: memref<1x128xf32, #tpu.memory_space<vmem>>, %arg4: memref<1x128xf32, #tpu.memory_space<vmem>>, %arg5: memref<128x128xbf16, #tpu.memory_space<vmem>>, %arg6: memref<1x128xf32, #tpu.memory_space<vmem>>, %arg7: memref<1x128xf32, #tpu.memory_space<vmem>>, %arg8: memref<32x128xbf16, #tpu.memory_space<vmem>>) attributes {dimension_semantics = [#tpu.dimension_semantics<parallel>], iteration_bounds = array<i64: 1>, scalar_prefetch = 0 : i64, scratch_operands = 0 : i64, tpu.core_type = #tpu.core_type<tc>, window_params = [{transform_indices = @transform_0, window_bounds = array<i64: 32, 256>}, {pipeline_mode = #tpu.pipeline_mode<synchronous>, transform_indices = @transform_1, window_bounds = array<i64: 256, 128>}, {pipeline_mode = #tpu.pipeline_mode<synchronous>, transform_indices = @transform_2, window_bounds = array<i64: 1, 128>}, {pipeline_mode = #tpu.pipeline_mode<synchronous>, transform_indices = @transform_3, window_bounds = array<i64: 1, 128>}, {pipeline_mode = #tpu.pipeline_mode<synchronous>, transform_indices = @transform_4, window_bounds = array<i64: 128, 128>}, {pipeline_mode = #tpu.pipeline_mode<synchronous>, transform_indices = @transform_5, window_bounds = array<i64: 1, 128>}, {pipeline_mode = #tpu.pipeline_mode<synchronous>, transform_indices = @transform_6, window_bounds = array<i64: 1, 128>}, {transform_indices = @transform_7, window_bounds = array<i64: 32, 128>}]} {
    %c0 = arith.constant 0 : index
    %c0_0 = arith.constant 0 : index
    %0 = vector.load %arg1[%c0, %c0_0] : memref<32x256xbf16, #tpu.memory_space<vmem>>, vector<32x256xbf16>
    %c0_1 = arith.constant 0 : index
    %c0_2 = arith.constant 0 : index
    %1 = vector.load %arg2[%c0_1, %c0_2] : memref<256x128xbf16, #tpu.memory_space<vmem>>, vector<256x128xbf16>
    %cst = arith.constant dense<0.000000e+00> : vector<32x128xf32>
    %2 = tpu.matmul %0, %1, %cst {dimension_numbers = #tpu.dot_dimension_numbers<[1], [0], [0], [1], [0, 0, 1, 1], [], []>} : vector<32x256xbf16>, vector<256x128xbf16>, vector<32x128xf32> -> vector<32x128xf32>
    %c0_3 = arith.constant 0 : index
    %c0_4 = arith.constant 0 : index
    %3 = vector.load %arg3[%c0_3, %c0_4] : memref<1x128xf32, #tpu.memory_space<vmem>>, vector<1x128xf32>
    %4 = vector.broadcast %3 : vector<1x128xf32> to vector<32x128xf32>
    %5 = arith.mulf %2, %4 : vector<32x128xf32>
    %c0_5 = arith.constant 0 : index
    %c0_6 = arith.constant 0 : index
    %6 = vector.load %arg4[%c0_5, %c0_6] : memref<1x128xf32, #tpu.memory_space<vmem>>, vector<1x128xf32>
    %7 = vector.broadcast %6 : vector<1x128xf32> to vector<32x128xf32>
    %8 = arith.addf %5, %7 : vector<32x128xf32>
    %cst_7 = arith.constant 0.000000e+00 : f32
    %9 = vector.broadcast %cst_7 : f32 to vector<32x128xf32>
    %10 = arith.subf %9, %8 : vector<32x128xf32>
    %cst_8 = arith.constant 8.000000e+01 : f32
    %11 = vector.broadcast %cst_8 : f32 to vector<32x128xf32>
    %12 = arith.minimumf %10, %11 : vector<32x128xf32>
    %13 = math.exp %12 : vector<32x128xf32>
    %cst_9 = arith.constant 1.000000e+00 : f32
    %14 = vector.broadcast %cst_9 : f32 to vector<32x128xf32>
    %15 = arith.addf %14, %13 : vector<32x128xf32>
    %16 = tpu.reciprocal %15 {approx = true} : vector<32x128xf32> -> vector<32x128xf32>
    %17 = arith.mulf %8, %16 : vector<32x128xf32>
    %18 = arith.truncf %17 : vector<32x128xf32> to vector<32x128xbf16>
    %c0_10 = arith.constant 0 : index
    %c0_11 = arith.constant 0 : index
    %19 = vector.load %arg5[%c0_10, %c0_11] : memref<128x128xbf16, #tpu.memory_space<vmem>>, vector<128x128xbf16>
    %cst_12 = arith.constant dense<0.000000e+00> : vector<32x128xf32>
    %20 = tpu.matmul %18, %19, %cst_12 {dimension_numbers = #tpu.dot_dimension_numbers<[1], [0], [0], [1], [0, 0, 1, 1], [], []>} : vector<32x128xbf16>, vector<128x128xbf16>, vector<32x128xf32> -> vector<32x128xf32>
    %c0_13 = arith.constant 0 : index
    %c0_14 = arith.constant 0 : index
    %21 = vector.load %arg6[%c0_13, %c0_14] : memref<1x128xf32, #tpu.memory_space<vmem>>, vector<1x128xf32>
    %22 = vector.broadcast %21 : vector<1x128xf32> to vector<32x128xf32>
    %23 = arith.mulf %20, %22 : vector<32x128xf32>
    %c0_15 = arith.constant 0 : index
    %c0_16 = arith.constant 0 : index
    %24 = vector.load %arg7[%c0_15, %c0_16] : memref<1x128xf32, #tpu.memory_space<vmem>>, vector<1x128xf32>
    %25 = vector.broadcast %24 : vector<1x128xf32> to vector<32x128xf32>
    %26 = arith.addf %23, %25 : vector<32x128xf32>
    %27 = arith.truncf %26 : vector<32x128xf32> to vector<32x128xbf16>
    %c0_17 = arith.constant 0 : index
    %c0_18 = arith.constant 0 : index
    %28 = vector.load %arg8[%c0_17, %c0_18] : memref<32x128xbf16, #tpu.memory_space<vmem>>, vector<32x128xbf16>
    tpu.vector_store %arg8[%c0_17, %c0_18], %27 {strides = array<i32>} : memref<32x128xbf16, #tpu.memory_space<vmem>>, vector<32x128xbf16>,
    return
  }
  func.func @transform_0(%arg0: i32) -> (i32, i32) {
    %c0_i32 = arith.constant 0 : i32
    %c0_i32_0 = arith.constant 0 : i32
    return %arg0, %c0_i32 : i32, i32
  }
  func.func @transform_1(%arg0: i32) -> (i32, i32) {
    %c0_i32 = arith.constant 0 : i32
    %c0_i32_0 = arith.constant 0 : i32
    %c0_i32_1 = arith.constant 0 : i32
    return %c0_i32, %c0_i32_0 : i32, i32
  }
  func.func @transform_2(%arg0: i32) -> (i32, i32) {
    %c0_i32 = arith.constant 0 : i32
    %c0_i32_0 = arith.constant 0 : i32
    %c0_i32_1 = arith.constant 0 : i32
    return %c0_i32, %c0_i32_0 : i32, i32
  }
  func.func @transform_3(%arg0: i32) -> (i32, i32) {
    %c0_i32 = arith.constant 0 : i32
    %c0_i32_0 = arith.constant 0 : i32
    %c0_i32_1 = arith.constant 0 : i32
    return %c0_i32, %c0_i32_0 : i32, i32
  }
  func.func @transform_4(%arg0: i32) -> (i32, i32) {
    %c0_i32 = arith.constant 0 : i32
    %c0_i32_0 = arith.constant 0 : i32
    %c0_i32_1 = arith.constant 0 : i32
    return %c0_i32, %c0_i32_0 : i32, i32
  }
  func.func @transform_5(%arg0: i32) -> (i32, i32) {
    %c0_i32 = arith.constant 0 : i32
    %c0_i32_0 = arith.constant 0 : i32
    %c0_i32_1 = arith.constant 0 : i32
    return %c0_i32, %c0_i32_0 : i32, i32
  }
  func.func @transform_6(%arg0: i32) -> (i32, i32) {
    %c0_i32 = arith.constant 0 : i32
    %c0_i32_0 = arith.constant 0 : i32
    %c0_i32_1 = arith.constant 0 : i32
    return %c0_i32, %c0_i32_0 : i32, i32
  }
  func.func @transform_7(%arg0: i32) -> (i32, i32) {
    %c0_i32 = arith.constant 0 : i32
    %c0_i32_0 = arith.constant 0 : i32
    return %arg0, %c0_i32 : i32, i32
  }
}

module attributes {stable_mosaic.version = 11 : i64} {
  func.func @_conv_bn_act_kernel(%arg0: i32, %arg1: memref<32x128xbf16, #tpu.memory_space<vmem>>, %arg2: memref<128x128xbf16, #tpu.memory_space<vmem>>, %arg3: memref<1x128xf32, #tpu.memory_space<vmem>>, %arg4: memref<1x128xf32, #tpu.memory_space<vmem>>, %arg5: memref<32x128xbf16, #tpu.memory_space<vmem>>, %arg6: memref<32x128xbf16, #tpu.memory_space<vmem>>, %arg7: memref<32x128xbf16, #tpu.memory_space<vmem>>) attributes {dimension_semantics = [#tpu.dimension_semantics<parallel>], iteration_bounds = array<i64: 1>, scalar_prefetch = 0 : i64, scratch_operands = 0 : i64, tpu.core_type = #tpu.core_type<tc>, window_params = [{transform_indices = @transform_0, window_bounds = array<i64: 32, 128>}, {pipeline_mode = #tpu.pipeline_mode<synchronous>, transform_indices = @transform_1, window_bounds = array<i64: 128, 128>}, {pipeline_mode = #tpu.pipeline_mode<synchronous>, transform_indices = @transform_2, window_bounds = array<i64: 1, 128>}, {pipeline_mode = #tpu.pipeline_mode<synchronous>, transform_indices = @transform_3, window_bounds = array<i64: 1, 128>}, {transform_indices = @transform_4, window_bounds = array<i64: 32, 128>}, {transform_indices = @transform_5, window_bounds = array<i64: 32, 128>}, {transform_indices = @transform_6, window_bounds = array<i64: 32, 128>}]} {
    %c0 = arith.constant 0 : index
    %c0_0 = arith.constant 0 : index
    %0 = vector.load %arg1[%c0, %c0_0] : memref<32x128xbf16, #tpu.memory_space<vmem>>, vector<32x128xbf16>
    %c0_1 = arith.constant 0 : index
    %c0_2 = arith.constant 0 : index
    %1 = vector.load %arg2[%c0_1, %c0_2] : memref<128x128xbf16, #tpu.memory_space<vmem>>, vector<128x128xbf16>
    %cst = arith.constant dense<0.000000e+00> : vector<32x128xf32>
    %2 = tpu.matmul %0, %1, %cst {dimension_numbers = #tpu.dot_dimension_numbers<[1], [0], [0], [1], [0, 0, 1, 1], [], []>} : vector<32x128xbf16>, vector<128x128xbf16>, vector<32x128xf32> -> vector<32x128xf32>
    %3 = arith.truncf %2 : vector<32x128xf32> to vector<32x128xbf16>
    %c0_3 = arith.constant 0 : index
    %c0_4 = arith.constant 0 : index
    %4 = vector.load %arg5[%c0_3, %c0_4] : memref<32x128xbf16, #tpu.memory_space<vmem>>, vector<32x128xbf16>
    tpu.vector_store %arg5[%c0_3, %c0_4], %3 {strides = array<i32>} : memref<32x128xbf16, #tpu.memory_space<vmem>>, vector<32x128xbf16>,
    %c0_5 = arith.constant 0 : index
    %c0_6 = arith.constant 0 : index
    %5 = vector.load %arg3[%c0_5, %c0_6] : memref<1x128xf32, #tpu.memory_space<vmem>>, vector<1x128xf32>
    %6 = vector.broadcast %5 : vector<1x128xf32> to vector<32x128xf32>
    %7 = arith.mulf %2, %6 : vector<32x128xf32>
    %c0_7 = arith.constant 0 : index
    %c0_8 = arith.constant 0 : index
    %8 = vector.load %arg4[%c0_7, %c0_8] : memref<1x128xf32, #tpu.memory_space<vmem>>, vector<1x128xf32>
    %9 = vector.broadcast %8 : vector<1x128xf32> to vector<32x128xf32>
    %10 = arith.addf %7, %9 : vector<32x128xf32>
    %11 = arith.truncf %10 : vector<32x128xf32> to vector<32x128xbf16>
    %c0_9 = arith.constant 0 : index
    %c0_10 = arith.constant 0 : index
    %12 = vector.load %arg6[%c0_9, %c0_10] : memref<32x128xbf16, #tpu.memory_space<vmem>>, vector<32x128xbf16>
    tpu.vector_store %arg6[%c0_9, %c0_10], %11 {strides = array<i32>} : memref<32x128xbf16, #tpu.memory_space<vmem>>, vector<32x128xbf16>,
    %cst_11 = arith.constant 0.000000e+00 : f32
    %13 = vector.broadcast %cst_11 : f32 to vector<32x128xf32>
    %14 = arith.subf %13, %10 : vector<32x128xf32>
    %cst_12 = arith.constant 8.000000e+01 : f32
    %15 = vector.broadcast %cst_12 : f32 to vector<32x128xf32>
    %16 = arith.minimumf %14, %15 : vector<32x128xf32>
    %17 = math.exp %16 : vector<32x128xf32>
    %cst_13 = arith.constant 1.000000e+00 : f32
    %18 = vector.broadcast %cst_13 : f32 to vector<32x128xf32>
    %19 = arith.addf %18, %17 : vector<32x128xf32>
    %20 = tpu.reciprocal %19 {approx = true} : vector<32x128xf32> -> vector<32x128xf32>
    %21 = arith.mulf %10, %20 : vector<32x128xf32>
    %22 = arith.truncf %21 : vector<32x128xf32> to vector<32x128xbf16>
    %c0_14 = arith.constant 0 : index
    %c0_15 = arith.constant 0 : index
    %23 = vector.load %arg7[%c0_14, %c0_15] : memref<32x128xbf16, #tpu.memory_space<vmem>>, vector<32x128xbf16>
    tpu.vector_store %arg7[%c0_14, %c0_15], %22 {strides = array<i32>} : memref<32x128xbf16, #tpu.memory_space<vmem>>, vector<32x128xbf16>,
    return
  }
  func.func @transform_0(%arg0: i32) -> (i32, i32) {
    %c0_i32 = arith.constant 0 : i32
    %c0_i32_0 = arith.constant 0 : i32
    return %arg0, %c0_i32 : i32, i32
  }
  func.func @transform_1(%arg0: i32) -> (i32, i32) {
    %c0_i32 = arith.constant 0 : i32
    %c0_i32_0 = arith.constant 0 : i32
    %c0_i32_1 = arith.constant 0 : i32
    return %c0_i32, %c0_i32_0 : i32, i32
  }
  func.func @transform_2(%arg0: i32) -> (i32, i32) {
    %c0_i32 = arith.constant 0 : i32
    %c0_i32_0 = arith.constant 0 : i32
    %c0_i32_1 = arith.constant 0 : i32
    return %c0_i32, %c0_i32_0 : i32, i32
  }
  func.func @transform_3(%arg0: i32) -> (i32, i32) {
    %c0_i32 = arith.constant 0 : i32
    %c0_i32_0 = arith.constant 0 : i32
    %c0_i32_1 = arith.constant 0 : i32
    return %c0_i32, %c0_i32_0 : i32, i32
  }
  func.func @transform_4(%arg0: i32) -> (i32, i32) {
    %c0_i32 = arith.constant 0 : i32
    %c0_i32_0 = arith.constant 0 : i32
    return %arg0, %c0_i32 : i32, i32
  }
  func.func @transform_5(%arg0: i32) -> (i32, i32) {
    %c0_i32 = arith.constant 0 : i32
    %c0_i32_0 = arith.constant 0 : i32
    return %arg0, %c0_i32 : i32, i32
  }
  func.func @transform_6(%arg0: i32) -> (i32, i32) {
    %c0_i32 = arith.constant 0 : i32
    %c0_i32_0 = arith.constant 0 : i32
    return %arg0, %c0_i32 : i32, i32
  }
}

module attributes {stable_mosaic.version = 11 : i64} {
  func.func @_pool_fc_kernel(%arg0: i32, %arg1: memref<2x16x128xbf16, #tpu.memory_space<vmem>>, %arg2: memref<128x128xbf16, #tpu.memory_space<vmem>>, %arg3: memref<1x128xf32, #tpu.memory_space<vmem>>, %arg4: memref<2x128xf32, #tpu.memory_space<vmem>>, %arg5: memref<2x128xf32, #tpu.memory_space<vmem>>) attributes {dimension_semantics = [#tpu.dimension_semantics<arbitrary>], iteration_bounds = array<i64: 1>, scalar_prefetch = 0 : i64, scratch_operands = 0 : i64, tpu.core_type = #tpu.core_type<tc>, window_params = [{transform_indices = @transform_0, window_bounds = array<i64: 2, 16, 128>}, {pipeline_mode = #tpu.pipeline_mode<synchronous>, transform_indices = @transform_1, window_bounds = array<i64: 128, 128>}, {pipeline_mode = #tpu.pipeline_mode<synchronous>, transform_indices = @transform_2, window_bounds = array<i64: 1, 128>}, {pipeline_mode = #tpu.pipeline_mode<synchronous>, transform_indices = @transform_3, window_bounds = array<i64: 2, 128>}, {pipeline_mode = #tpu.pipeline_mode<synchronous>, transform_indices = @transform_4, window_bounds = array<i64: 2, 128>}]} {
    %c0_i32 = arith.constant 0 : i32
    %0 = arith.cmpi eq, %arg0, %c0_i32 : i32
    %1 = arith.extui %0 : i1 to i32
    %c0_i32_0 = arith.constant 0 : i32
    %2 = arith.cmpi ne, %1, %c0_i32_0 : i32
    scf.if %2 {
      %cst_9 = arith.constant 0.000000e+00 : f32
      %12 = vector.broadcast %cst_9 : f32 to vector<2x128xf32>
      %c0_10 = arith.constant 0 : index
      %c0_11 = arith.constant 0 : index
      %13 = vector.load %arg4[%c0_10, %c0_11] : memref<2x128xf32, #tpu.memory_space<vmem>>, vector<2x128xf32>
      tpu.vector_store %arg4[%c0_10, %c0_11], %12 {strides = array<i32>} : memref<2x128xf32, #tpu.memory_space<vmem>>, vector<2x128xf32>,
    } else {
    }
    %c0 = arith.constant 0 : index
    %c0_1 = arith.constant 0 : index
    %3 = vector.load %arg4[%c0, %c0_1] : memref<2x128xf32, #tpu.memory_space<vmem>>, vector<2x128xf32>
    %c0_2 = arith.constant 0 : index
    %c0_3 = arith.constant 0 : index
    %c0_4 = arith.constant 0 : index
    %4 = vector.load %arg1[%c0_2, %c0_3, %c0_4] : memref<2x16x128xbf16, #tpu.memory_space<vmem>>, vector<2x16x128xbf16>
    %5 = arith.extf %4 : vector<2x16x128xbf16> to vector<2x16x128xf32>
    %cst = arith.constant dense<0.000000e+00> : vector<2x128xf32>
    %6 = vector.multi_reduction <add>, %5, %cst [1] : vector<2x16x128xf32> to vector<2x128xf32>
    %7 = arith.addf %3, %6 : vector<2x128xf32>
    %c0_5 = arith.constant 0 : index
    %c0_6 = arith.constant 0 : index
    %8 = vector.load %arg4[%c0_5, %c0_6] : memref<2x128xf32, #tpu.memory_space<vmem>>, vector<2x128xf32>
    tpu.vector_store %arg4[%c0_5, %c0_6], %7 {strides = array<i32>} : memref<2x128xf32, #tpu.memory_space<vmem>>, vector<2x128xf32>,
    %c0_i32_7 = arith.constant 0 : i32
    %9 = arith.cmpi eq, %arg0, %c0_i32_7 : i32
    %10 = arith.extui %9 : i1 to i32
    %c0_i32_8 = arith.constant 0 : i32
    %11 = arith.cmpi ne, %10, %c0_i32_8 : i32
    scf.if %11 {
      %c0_9 = arith.constant 0 : index
      %c0_10 = arith.constant 0 : index
      %12 = vector.load %arg4[%c0_9, %c0_10] : memref<2x128xf32, #tpu.memory_space<vmem>>, vector<2x128xf32>
      %cst_11 = arith.constant 6.250000e-02 : f32
      %13 = vector.broadcast %cst_11 : f32 to vector<2x128xf32>
      %14 = arith.mulf %12, %13 : vector<2x128xf32>
      %c0_12 = arith.constant 0 : index
      %c0_13 = arith.constant 0 : index
      %15 = vector.load %arg4[%c0_12, %c0_13] : memref<2x128xf32, #tpu.memory_space<vmem>>, vector<2x128xf32>
      tpu.vector_store %arg4[%c0_12, %c0_13], %14 {strides = array<i32>} : memref<2x128xf32, #tpu.memory_space<vmem>>, vector<2x128xf32>,
      %16 = arith.truncf %14 : vector<2x128xf32> to vector<2x128xbf16>
      %c0_14 = arith.constant 0 : index
      %c0_15 = arith.constant 0 : index
      %17 = vector.load %arg2[%c0_14, %c0_15] : memref<128x128xbf16, #tpu.memory_space<vmem>>, vector<128x128xbf16>
      %cst_16 = arith.constant dense<0.000000e+00> : vector<2x128xf32>
      %18 = tpu.matmul %16, %17, %cst_16 {dimension_numbers = #tpu.dot_dimension_numbers<[1], [0], [0], [1], [0, 0, 1, 1], [], []>} : vector<2x128xbf16>, vector<128x128xbf16>, vector<2x128xf32> -> vector<2x128xf32>
      %c0_17 = arith.constant 0 : index
      %c0_18 = arith.constant 0 : index
      %19 = vector.load %arg3[%c0_17, %c0_18] : memref<1x128xf32, #tpu.memory_space<vmem>>, vector<1x128xf32>
      %20 = vector.broadcast %19 : vector<1x128xf32> to vector<2x128xf32>
      %21 = arith.addf %18, %20 : vector<2x128xf32>
      %c0_19 = arith.constant 0 : index
      %c0_20 = arith.constant 0 : index
      %22 = vector.load %arg5[%c0_19, %c0_20] : memref<2x128xf32, #tpu.memory_space<vmem>>, vector<2x128xf32>
      tpu.vector_store %arg5[%c0_19, %c0_20], %21 {strides = array<i32>} : memref<2x128xf32, #tpu.memory_space<vmem>>, vector<2x128xf32>,
    } else {
    }
    return
  }
  func.func @transform_0(%arg0: i32) -> (i32, i32, i32) {
    %c0_i32 = arith.constant 0 : i32
    %c0_i32_0 = arith.constant 0 : i32
    %c0_i32_1 = arith.constant 0 : i32
    return %c0_i32, %arg0, %c0_i32_0 : i32, i32, i32
  }
  func.func @transform_1(%arg0: i32) -> (i32, i32) {
    %c0_i32 = arith.constant 0 : i32
    %c0_i32_0 = arith.constant 0 : i32
    %c0_i32_1 = arith.constant 0 : i32
    return %c0_i32, %c0_i32_0 : i32, i32
  }
  func.func @transform_2(%arg0: i32) -> (i32, i32) {
    %c0_i32 = arith.constant 0 : i32
    %c0_i32_0 = arith.constant 0 : i32
    %c0_i32_1 = arith.constant 0 : i32
    return %c0_i32, %c0_i32_0 : i32, i32
  }
  func.func @transform_3(%arg0: i32) -> (i32, i32) {
    %c0_i32 = arith.constant 0 : i32
    %c0_i32_0 = arith.constant 0 : i32
    %c0_i32_1 = arith.constant 0 : i32
    return %c0_i32, %c0_i32_0 : i32, i32
  }
  func.func @transform_4(%arg0: i32) -> (i32, i32) {
    %c0_i32 = arith.constant 0 : i32
    %c0_i32_0 = arith.constant 0 : i32
    %c0_i32_1 = arith.constant 0 : i32
    return %c0_i32, %c0_i32_0 : i32, i32
  }
}

</mosaic_0001>

<llo_original>
// kernel: _lambda_.6
$region0: #{_lambda_.6}
  #allocation0 [shape = 'u32[]', space=smem, size = 0x4, offset = 0x4, fixed_abs, tag = 'smem constant byte address 0x4 - core index']
  #allocation1 [shape = 'u32[144,128]{1,0:T(1,128)}', space=vmem, size = 0x12000, scoped, tag = 'internal scratch']
  %s0 = inlined_call_operand.vmem [shape: bf16[128,128], index: 0, kind: input, shape index: {}]
  %s1 = inlined_call_operand.vmem [shape: bf16[128,128], index: 1, kind: input, shape index: {}]
  %s2 = inlined_call_operand.vmem [shape: f32[1,128], index: 2, kind: input, shape index: {}]
  %s3 = inlined_call_operand.vmem [shape: f32[1,128], index: 3, kind: input, shape index: {}]
  %s4 = inlined_call_operand.vmem [shape: bf16[128,128], index: 4, kind: output, shape index: {0}]
  %s5 = inlined_call_operand.vmem [shape: bf16[128,128], index: 5, kind: output, shape index: {1}]
  %s6 = inlined_call_operand.vmem [shape: bf16[128,128], index: 6, kind: output, shape index: {2}]
  %7 = xla_tuple %s4, %s5, %s6
  %s8 = sld [smem:[#allocation0]]
  $region42: #{_lambda_.6} parent=0
    _
  %s10 = ssub.s32 1, %s8
  %s11 = scalar_select 0, %s10, %s8
  // Predicated region
  $region2: #{_lambda_.6} parent=0 // pred_check
    _
  $region3: #{_lambda_.6} parent=0 // pred_check_branch
    %13 = sbr.rel (0) target = $region5
  $region4: #{_lambda_.6} parent=0 // pred_region
    _
  $region5: #{_lambda_.6} parent=0 // pred_fallthru
    _
  // Predicated region
  $region6: #{_lambda_.6} parent=0 // pred_check
    _
  $region7: #{_lambda_.6} parent=0 // pred_check_branch
    %15 = sbr.rel (0) target = $region9
  $region8: #{_lambda_.6} parent=0 // pred_region
    _
  $region9: #{_lambda_.6} parent=0 // pred_fallthru
    _
  // Predicated region
  $region10: #{_lambda_.6} parent=0 // pred_check
    _
  $region11: #{_lambda_.6} parent=0 // pred_check_branch
    %17 = sbr.rel (0) target = $region13
  $region12: #{_lambda_.6} parent=0 // pred_region
    _
  $region13: #{_lambda_.6} parent=0 // pred_fallthru
    _
  // Predicated region
  $region14: #{_lambda_.6} parent=0 // pred_check
    _
  $region15: #{_lambda_.6} parent=0 // pred_check_branch
    %19 = sbr.rel (0) target = $region17
  $region16: #{_lambda_.6} parent=0 // pred_region
    _
  $region17: #{_lambda_.6} parent=0 // pred_fallthru
    _
  %v21 = vld [vmem:[%s0] sm:$0xf]
  %v22 = vld [vmem:[%s0 + $0x4] sm:$0xf]
  %v23 = vld [vmem:[%s0 + $0x8] sm:$0xf]
  %v24 = vld [vmem:[%s0 + $0xc] sm:$0xf]
  %v25 = vld [vmem:[%s0 + $0x10] sm:$0xf]
  %v26 = vld [vmem:[%s0 + $0x14] sm:$0xf]
  %v27 = vld [vmem:[%s0 + $0x18] sm:$0xf]
  %v28 = vld [vmem:[%s0 + $0x1c] sm:$0xf]
  %v29 = vld [vmem:[%s0 + $0x20] sm:$0xf]
  %v30 = vld [vmem:[%s0 + $0x24] sm:$0xf]
  %v31 = vld [vmem:[%s0 + $0x28] sm:$0xf]
  %v32 = vld [vmem:[%s0 + $0x2c] sm:$0xf]
  %v33 = vld [vmem:[%s0 + $0x30] sm:$0xf]
  %v34 = vld [vmem:[%s0 + $0x34] sm:$0xf]
  %v35 = vld [vmem:[%s0 + $0x38] sm:$0xf]
  %v36 = vld [vmem:[%s0 + $0x3c] sm:$0xf]
  %v37 = vld [vmem:[%s1] sm:$0xf]
  %v38 = vld [vmem:[%s1 + $0x4] sm:$0xf]
  %v39 = vld [vmem:[%s1 + $0x8] sm:$0xf]
  %v40 = vld [vmem:[%s1 + $0xc] sm:$0xf]
  %v41 = vld [vmem:[%s1 + $0x10] sm:$0xf]
  %v42 = vld [vmem:[%s1 + $0x14] sm:$0xf]
  %v43 = vld [vmem:[%s1 + $0x18] sm:$0xf]
  %v44 = vld [vmem:[%s1 + $0x1c] sm:$0xf]
  %v45 = vld [vmem:[%s1 + $0x20] sm:$0xf]
  %v46 = vld [vmem:[%s1 + $0x24] sm:$0xf]
  %v47 = vld [vmem:[%s1 + $0x28] sm:$0xf]
  %v48 = vld [vmem:[%s1 + $0x2c] sm:$0xf]
  %v49 = vld [vmem:[%s1 + $0x30] sm:$0xf]
  %v50 = vld [vmem:[%s1 + $0x34] sm:$0xf]
  %v51 = vld [vmem:[%s1 + $0x38] sm:$0xf]
  %v52 = vld [vmem:[%s1 + $0x3c] sm:$0xf]
  %v69 = vunpack.c.l.b16 %v21
  %v70 = vunpack.c.l.b16 %v22
  %v71 = vunpack.c.l.b16 %v23
  %v72 = vunpack.c.l.b16 %v24
  %v73 = vunpack.c.l.b16 %v25
  %v74 = vunpack.c.l.b16 %v26
  %v75 = vunpack.c.l.b16 %v27
  %v76 = vunpack.c.l.b16 %v28
  %v77 = vunpack.c.l.b16 %v29
  %v78 = vunpack.c.l.b16 %v30
  %v79 = vunpack.c.l.b16 %v31
  %v80 = vunpack.c.l.b16 %v32
  %v81 = vunpack.c.l.b16 %v33
  %v82 = vunpack.c.l.b16 %v34
  %v83 = vunpack.c.l.b16 %v35
  %v84 = vunpack.c.l.b16 %v36
  %v85 = vpack.c.b16 %v70, %v69
  %v86 = vpack.c.b16 %v72, %v71
  %v87 = vpack.c.b16 %v74, %v73
  %v88 = vpack.c.b16 %v76, %v75
  %v89 = vpack.c.b16 %v78, %v77
  %v90 = vpack.c.b16 %v80, %v79
  %v91 = vpack.c.b16 %v82, %v81
  %v92 = vpack.c.b16 %v84, %v83
  %v117 = vunpack.c.l.b16 %v37
  %v118 = vunpack.c.l.b16 %v38
  %v119 = vunpack.c.l.b16 %v39
  %v120 = vunpack.c.l.b16 %v40
  %v121 = vunpack.c.l.b16 %v41
  %v122 = vunpack.c.l.b16 %v42
  %v123 = vunpack.c.l.b16 %v43
  %v124 = vunpack.c.l.b16 %v44
  %v125 = vunpack.c.l.b16 %v45
  %v126 = vunpack.c.l.b16 %v46
  %v127 = vunpack.c.l.b16 %v47
  %v128 = vunpack.c.l.b16 %v48
  %v129 = vunpack.c.l.b16 %v49
  %v130 = vunpack.c.l.b16 %v50
  %v131 = vunpack.c.l.b16 %v51
  %v132 = vunpack.c.l.b16 %v52
  %v133 = vpack.c.b16 %v118, %v117
  %v134 = vpack.c.b16 %v120, %v119
  %v135 = vpack.c.b16 %v122, %v121
  %v136 = vpack.c.b16 %v124, %v123
  %v137 = vpack.c.b16 %v126, %v125
  %v138 = vpack.c.b16 %v128, %v127
  %v139 = vpack.c.b16 %v130, %v129
  %v140 = vpack.c.b16 %v132, %v131
  %149 = vmatprep.subr.bf16.mxu0 0
  %150 = vmatpush1.bf16.msra.mxu0 %v133
  %151 = vmatprep.subr.bf16.mxu0 0
  %152 = vmatpush1.bf16.msra.mxu0 %v134
  %153 = vmatprep.subr.bf16.mxu0 0
  %154 = vmatpush1.bf16.msra.mxu0 %v135
  %155 = vmatprep.subr.bf16.mxu0 0
  %156 = vmatpush1.bf16.msra.mxu0 %v136
  %157 = vmatprep.subr.bf16.mxu0 0
  %158 = vmatpush1.bf16.msra.mxu0 %v137
  %159 = vmatprep.subr.bf16.mxu0 0
  %160 = vmatpush1.bf16.msra.mxu0 %v138
  %161 = vmatprep.subr.bf16.mxu0 0
  %162 = vmatpush1.bf16.msra.mxu0 %v139
  %163 = vmatprep.subr.bf16.mxu0 0
  %164 = vmatpush1.bf16.msra.mxu0 %v140
  %165 = vmatprep.subr.bf16.mxu0 0
  %166 = vmatpush1.bf16.msra.mxu0 0
  %167 = vmatprep.subr.bf16.mxu0 0
  %168 = vmatpush1.bf16.msra.mxu0 0
  %169 = vmatprep.subr.bf16.mxu0 0
  %170 = vmatpush1.bf16.msra.mxu0 0
  %171 = vmatprep.subr.bf16.mxu0 0
  %172 = vmatpush1.bf16.msra.mxu0 0
  %173 = vmatprep.subr.bf16.mxu0 0
  %174 = vmatpush1.bf16.msra.mxu0 0
  %175 = vmatprep.subr.bf16.mxu0 0
  %176 = vmatpush1.bf16.msra.mxu0 0
  %177 = vmatprep.subr.bf16.mxu0 0
  %178 = vmatpush1.bf16.msra.mxu0 0
  %179 = vmatprep.subr.bf16.mxu0 0
  %180 = vmatpush1.bf16.msra.mxu0 0
  %181 = vmatprep.mubr.bf16.mxu0 0
  %182 = vmatmul.mubr.bf16.gmra.mrb[0].mxu0 %v85
  %v183 = vpop.f32.mrb[0].mxu0
  %v184 = vadd.f32 0.0, %v183
  %v185 = vpop.f32.mrb[0].mxu0
  %v186 = vpop.f32.mrb[0].mxu0
  %v187 = vadd.f32 0.0, %v186
  %v188 = vpop.f32.mrb[0].mxu0
  %189 = vmatprep.mubr.bf16.mxu0 0
  %190 = vmatmul.mubr.bf16.gmra.mrb[0].mxu0 %v86
  %v191 = vpop.f32.mrb[0].mxu0
  %v192 = vadd.f32 0.0, %v191
  %v193 = vpop.f32.mrb[0].mxu0
  %v194 = vpop.f32.mrb[0].mxu0
  %v195 = vadd.f32 0.0, %v194
  %v196 = vpop.f32.mrb[0].mxu0
  %197 = vmatprep.mubr.bf16.mxu0 0
  %198 = vmatmul.mubr.bf16.gmra.mrb[0].mxu0 %v87
  %v199 = vpop.f32.mrb[0].mxu0
  %v200 = vadd.f32 0.0, %v199
  %v201 = vpop.f32.mrb[0].mxu0
  %v202 = vpop.f32.mrb[0].mxu0
  %v203 = vadd.f32 0.0, %v202
  %v204 = vpop.f32.mrb[0].mxu0
  %205 = vmatprep.mubr.bf16.mxu0 0
  %206 = vmatmul.mubr.bf16.gmra.mrb[0].mxu0 %v88
  %v207 = vpop.f32.mrb[0].mxu0
  %v208 = vadd.f32 0.0, %v207
  %v209 = vpop.f32.mrb[0].mxu0
  %v210 = vpop.f32.mrb[0].mxu0
  %v211 = vadd.f32 0.0, %v210
  %v212 = vpop.f32.mrb[0].mxu0
  %213 = vmatprep.mubr.bf16.mxu0 0
  %214 = vmatmul.mubr.bf16.gmra.mrb[0].mxu0 %v89
  %v215 = vpop.f32.mrb[0].mxu0
  %v216 = vadd.f32 0.0, %v215
  %v217 = vpop.f32.mrb[0].mxu0
  %v218 = vpop.f32.mrb[0].mxu0
  %v219 = vadd.f32 0.0, %v218
  %v220 = vpop.f32.mrb[0].mxu0
  %221 = vmatprep.mubr.bf16.mxu0 0
  %222 = vmatmul.mubr.bf16.gmra.mrb[0].mxu0 %v90
  %v223 = vpop.f32.mrb[0].mxu0
  %v224 = vadd.f32 0.0, %v223
  %v225 = vpop.f32.mrb[0].mxu0
  %v226 = vpop.f32.mrb[0].mxu0
  %v227 = vadd.f32 0.0, %v226
  %v228 = vpop.f32.mrb[0].mxu0
  %229 = vmatprep.mubr.bf16.mxu0 0
  %230 = vmatmul.mubr.bf16.gmra.mrb[0].mxu0 %v91
  %v231 = vpop.f32.mrb[0].mxu0
  %v232 = vadd.f32 0.0, %v231
  %v233 = vpop.f32.mrb[0].mxu0
  %v234 = vpop.f32.mrb[0].mxu0
  %v235 = vadd.f32 0.0, %v234
  %v236 = vpop.f32.mrb[0].mxu0
  %237 = vmatprep.mubr.bf16.mxu0 0
  %238 = vmatmul.mubr.bf16.gmra.mrb[0].mxu0 %v92
  %v239 = vpop.f32.mrb[0].mxu0
  %v240 = vadd.f32 0.0, %v239
  %v241 = vpop.f32.mrb[0].mxu0
  %v242 = vpop.f32.mrb[0].mxu0
  %v243 = vadd.f32 0.0, %v242
  %v244 = vpop.f32.mrb[0].mxu0
  %245 = vdwg.mxu0
  %v246 = vpack.c.bf16 %v187, %v184
  %v247 = vpack.c.bf16 %v195, %v192
  %v248 = vpack.c.bf16 %v203, %v200
  %v249 = vpack.c.bf16 %v211, %v208
  %v250 = vpack.c.bf16 %v219, %v216
  %v251 = vpack.c.bf16 %v227, %v224
  %v252 = vpack.c.bf16 %v235, %v232
  %v253 = vpack.c.bf16 %v243, %v240
  %v262 = vunpack.c.l.b16 %v246
  %v263 = vunpack.c.h.b16 %v246
  %v264 = vunpack.c.l.b16 %v247
  %v265 = vunpack.c.h.b16 %v247
  %v266 = vunpack.c.l.b16 %v248
  %v267 = vunpack.c.h.b16 %v248
  %v268 = vunpack.c.l.b16 %v249
  %v269 = vunpack.c.h.b16 %v249
  %v270 = vunpack.c.l.b16 %v250
  %v271 = vunpack.c.h.b16 %v250
  %v272 = vunpack.c.l.b16 %v251
  %v273 = vunpack.c.h.b16 %v251
  %v274 = vunpack.c.l.b16 %v252
  %v275 = vunpack.c.h.b16 %v252
  %v276 = vunpack.c.l.b16 %v253
  %v277 = vunpack.c.h.b16 %v253
  %v278 = vpack.c.b16 %v262, %v262
  %v279 = vpack.c.b16 %v263, %v263
  %v280 = vpack.c.b16 %v264, %v264
  %v281 = vpack.c.b16 %v265, %v265
  %v282 = vpack.c.b16 %v266, %v266
  %v283 = vpack.c.b16 %v267, %v267
  %v284 = vpack.c.b16 %v268, %v268
  %v285 = vpack.c.b16 %v269, %v269
  %v286 = vpack.c.b16 %v270, %v270
  %v287 = vpack.c.b16 %v271, %v271
  %v288 = vpack.c.b16 %v272, %v272
  %v289 = vpack.c.b16 %v273, %v273
  %v290 = vpack.c.b16 %v274, %v274
  %v291 = vpack.c.b16 %v275, %v275
  %v292 = vpack.c.b16 %v276, %v276
  %v293 = vpack.c.b16 %v277, %v277
  %310 = vst [vmem:[%s4] sm:$0xf] %v278
  %311 = vst [vmem:[%s4 + $0x4] sm:$0xf] %v279
  %312 = vst [vmem:[%s4 + $0x8] sm:$0xf] %v280
  %313 = vst [vmem:[%s4 + $0xc] sm:$0xf] %v281
  %314 = vst [vmem:[%s4 + $0x10] sm:$0xf] %v282
  %315 = vst [vmem:[%s4 + $0x14] sm:$0xf] %v283
  %316 = vst [vmem:[%s4 + $0x18] sm:$0xf] %v284
  %317 = vst [vmem:[%s4 + $0x1c] sm:$0xf] %v285
  %318 = vst [vmem:[%s4 + $0x20] sm:$0xf] %v286
  %319 = vst [vmem:[%s4 + $0x24] sm:$0xf] %v287
  %320 = vst [vmem:[%s4 + $0x28] sm:$0xf] %v288
  %321 = vst [vmem:[%s4 + $0x2c] sm:$0xf] %v289
  %322 = vst [vmem:[%s4 + $0x30] sm:$0xf] %v290
  %323 = vst [vmem:[%s4 + $0x34] sm:$0xf] %v291
  %324 = vst [vmem:[%s4 + $0x38] sm:$0xf] %v292
  %325 = vst [vmem:[%s4 + $0x3c] sm:$0xf] %v293
  %v326 = vld [vmem:[%s2] sm:$0x1]
  %v328 = vlaneseq
  %v329 = vshrl.u32 %v328, 7
  %v330 = vsub.s32 0, %v329
  %v331 = vrot.slane %v326, %v330
  %v333 = vmul.f32 %v184, %v331
  %v334 = vmul.f32 %v187, %v331
  %v335 = vmul.f32 %v192, %v331
  %v336 = vmul.f32 %v195, %v331
  %v337 = vmul.f32 %v200, %v331
  %v338 = vmul.f32 %v203, %v331
  %v339 = vmul.f32 %v208, %v331
  %v340 = vmul.f32 %v211, %v331
  %v341 = vmul.f32 %v216, %v331
  %v342 = vmul.f32 %v219, %v331
  %v343 = vmul.f32 %v224, %v331
  %v344 = vmul.f32 %v227, %v331
  %v345 = vmul.f32 %v232, %v331
  %v346 = vmul.f32 %v235, %v331
  %v347 = vmul.f32 %v240, %v331
  %v348 = vmul.f32 %v243, %v331
  %v349 = vld [vmem:[%s3] sm:$0x1]
  %v351 = vlaneseq
  %v352 = vshrl.u32 %v351, 7
  %v353 = vsub.s32 0, %v352
  %v354 = vrot.slane %v349, %v353
  %v356 = vadd.f32 %v333, %v354
  %v357 = vadd.f32 %v334, %v354
  %v358 = vadd.f32 %v335, %v354
  %v359 = vadd.f32 %v336, %v354
  %v360 = vadd.f32 %v337, %v354
  %v361 = vadd.f32 %v338, %v354
  %v362 = vadd.f32 %v339, %v354
  %v363 = vadd.f32 %v340, %v354
  %v364 = vadd.f32 %v341, %v354
  %v365 = vadd.f32 %v342, %v354
  %v366 = vadd.f32 %v343, %v354
  %v367 = vadd.f32 %v344, %v354
  %v368 = vadd.f32 %v345, %v354
  %v369 = vadd.f32 %v346, %v354
  %v370 = vadd.f32 %v347, %v354
  %v371 = vadd.f32 %v348, %v354
  %v372 = vpack.c.bf16 %v357, %v356
  %v373 = vpack.c.bf16 %v359, %v358
  %v374 = vpack.c.bf16 %v361, %v360
  %v375 = vpack.c.bf16 %v363, %v362
  %v376 = vpack.c.bf16 %v365, %v364
  %v377 = vpack.c.bf16 %v367, %v366
  %v378 = vpack.c.bf16 %v369, %v368
  %v379 = vpack.c.bf16 %v371, %v370
  %v388 = vunpack.c.l.b16 %v372
  %v389 = vunpack.c.h.b16 %v372
  %v390 = vunpack.c.l.b16 %v373
  %v391 = vunpack.c.h.b16 %v373
  %v392 = vunpack.c.l.b16 %v374
  %v393 = vunpack.c.h.b16 %v374
  %v394 = vunpack.c.l.b16 %v375
  %v395 = vunpack.c.h.b16 %v375
  %v396 = vunpack.c.l.b16 %v376
  %v397 = vunpack.c.h.b16 %v376
  %v398 = vunpack.c.l.b16 %v377
  %v399 = vunpack.c.h.b16 %v377
  %v400 = vunpack.c.l.b16 %v378
  %v401 = vunpack.c.h.b16 %v378
  %v402 = vunpack.c.l.b16 %v379
  %v403 = vunpack.c.h.b16 %v379
  %v404 = vpack.c.b16 %v388, %v388
  %v405 = vpack.c.b16 %v389, %v389
  %v406 = vpack.c.b16 %v390, %v390
  %v407 = vpack.c.b16 %v391, %v391
  %v408 = vpack.c.b16 %v392, %v392
  %v409 = vpack.c.b16 %v393, %v393
  %v410 = vpack.c.b16 %v394, %v394
  %v411 = vpack.c.b16 %v395, %v395
  %v412 = vpack.c.b16 %v396, %v396
  %v413 = vpack.c.b16 %v397, %v397
  %v414 = vpack.c.b16 %v398, %v398
  %v415 = vpack.c.b16 %v399, %v399
  %v416 = vpack.c.b16 %v400, %v400
  %v417 = vpack.c.b16 %v401, %v401
  %v418 = vpack.c.b16 %v402, %v402
  %v419 = vpack.c.b16 %v403, %v403
  %436 = vst [vmem:[%s5] sm:$0xf] %v404
  %437 = vst [vmem:[%s5 + $0x4] sm:$0xf] %v405
  %438 = vst [vmem:[%s5 + $0x8] sm:$0xf] %v406
  %439 = vst [vmem:[%s5 + $0xc] sm:$0xf] %v407
  %440 = vst [vmem:[%s5 + $0x10] sm:$0xf] %v408
  %441 = vst [vmem:[%s5 + $0x14] sm:$0xf] %v409
  %442 = vst [vmem:[%s5 + $0x18] sm:$0xf] %v410
  %443 = vst [vmem:[%s5 + $0x1c] sm:$0xf] %v411
  %444 = vst [vmem:[%s5 + $0x20] sm:$0xf] %v412
  %445 = vst [vmem:[%s5 + $0x24] sm:$0xf] %v413
  %446 = vst [vmem:[%s5 + $0x28] sm:$0xf] %v414
  %447 = vst [vmem:[%s5 + $0x2c] sm:$0xf] %v415
  %448 = vst [vmem:[%s5 + $0x30] sm:$0xf] %v416
  %449 = vst [vmem:[%s5 + $0x34] sm:$0xf] %v417
  %450 = vst [vmem:[%s5 + $0x38] sm:$0xf] %v418
  %451 = vst [vmem:[%s5 + $0x3c] sm:$0xf] %v419
  %v452 = vsub.f32 0.0, %v356
  %v453 = vsub.f32 0.0, %v357
  %v454 = vsub.f32 0.0, %v358
  %v455 = vsub.f32 0.0, %v359
  %v456 = vsub.f32 0.0, %v360
  %v457 = vsub.f32 0.0, %v361
  %v458 = vsub.f32 0.0, %v362
  %v459 = vsub.f32 0.0, %v363
  %v460 = vsub.f32 0.0, %v364
  %v461 = vsub.f32 0.0, %v365
  %v462 = vsub.f32 0.0, %v366
  %v463 = vsub.f32 0.0, %v367
  %v464 = vsub.f32 0.0, %v368
  %v465 = vsub.f32 0.0, %v369
  %v466 = vsub.f32 0.0, %v370
  %v467 = vsub.f32 0.0, %v371
  %v468 = vmin.f32 %v452, 80.0
  %v469 = vmin.f32 %v453, 80.0
  %v470 = vmin.f32 %v454, 80.0
  %v471 = vmin.f32 %v455, 80.0
  %v472 = vmin.f32 %v456, 80.0
  %v473 = vmin.f32 %v457, 80.0
  %v474 = vmin.f32 %v458, 80.0
  %v475 = vmin.f32 %v459, 80.0
  %v476 = vmin.f32 %v460, 80.0
  %v477 = vmin.f32 %v461, 80.0
  %v478 = vmin.f32 %v462, 80.0
  %v479 = vmin.f32 %v463, 80.0
  %v480 = vmin.f32 %v464, 80.0
  %v481 = vmin.f32 %v465, 80.0
  %v482 = vmin.f32 %v466, 80.0
  %v483 = vmin.f32 %v467, 80.0
  %v484 = vmul.f32 %v468, 1.442695
  %v485 = vpow.pop %v484
  %v486 = vmul.f32 %v469, 1.442695
  %v487 = vpow.pop %v486
  %v488 = vmul.f32 %v470, 1.442695
  %v489 = vpow.pop %v488
  %v490 = vmul.f32 %v471, 1.442695
  %v491 = vpow.pop %v490
  %v492 = vmul.f32 %v472, 1.442695
  %v493 = vpow.pop %v492
  %v494 = vmul.f32 %v473, 1.442695
  %v495 = vpow.pop %v494
  %v496 = vmul.f32 %v474, 1.442695
  %v497 = vpow.pop %v496
  %v498 = vmul.f32 %v475, 1.442695
  %v499 = vpow.pop %v498
  %v500 = vmul.f32 %v476, 1.442695
  %v501 = vpow.pop %v500
  %v502 = vmul.f32 %v477, 1.442695
  %v503 = vpow.pop %v502
  %v504 = vmul.f32 %v478, 1.442695
  %v505 = vpow.pop %v504
  %v506 = vmul.f32 %v479, 1.442695
  %v507 = vpow.pop %v506
  %v508 = vmul.f32 %v480, 1.442695
  %v509 = vpow.pop %v508
  %v510 = vmul.f32 %v481, 1.442695
  %v511 = vpow.pop %v510
  %v512 = vmul.f32 %v482, 1.442695
  %v513 = vpow.pop %v512
  %v514 = vmul.f32 %v483, 1.442695
  %v515 = vpow.pop %v514
  %v516 = vadd.f32 %v485, 1.0
  %v517 = vadd.f32 %v487, 1.0
  %v518 = vadd.f32 %v489, 1.0
  %v519 = vadd.f32 %v491, 1.0
  %v520 = vadd.f32 %v493, 1.0
  %v521 = vadd.f32 %v495, 1.0
  %v522 = vadd.f32 %v497, 1.0
  %v523 = vadd.f32 %v499, 1.0
  %v524 = vadd.f32 %v501, 1.0
  %v525 = vadd.f32 %v503, 1.0
  %v526 = vadd.f32 %v505, 1.0
  %v527 = vadd.f32 %v507, 1.0
  %v528 = vadd.f32 %v509, 1.0
  %v529 = vadd.f32 %v511, 1.0
  %v530 = vadd.f32 %v513, 1.0
  %v531 = vadd.f32 %v515, 1.0
  %v532 = vrcp.pop %v516
  %v533 = vrcp.pop %v517
  %v534 = vrcp.pop %v518
  %v535 = vrcp.pop %v519
  %v536 = vrcp.pop %v520
  %v537 = vrcp.pop %v521
  %v538 = vrcp.pop %v522
  %v539 = vrcp.pop %v523
  %v540 = vrcp.pop %v524
  %v541 = vrcp.pop %v525
  %v542 = vrcp.pop %v526
  %v543 = vrcp.pop %v527
  %v544 = vrcp.pop %v528
  %v545 = vrcp.pop %v529
  %v546 = vrcp.pop %v530
  %v547 = vrcp.pop %v531
  %v548 = vmul.f32 %v356, %v532
  %v549 = vmul.f32 %v357, %v533
  %v550 = vmul.f32 %v358, %v534
  %v551 = vmul.f32 %v359, %v535
  %v552 = vmul.f32 %v360, %v536
  %v553 = vmul.f32 %v361, %v537
  %v554 = vmul.f32 %v362, %v538
  %v555 = vmul.f32 %v363, %v539
  %v556 = vmul.f32 %v364, %v540
  %v557 = vmul.f32 %v365, %v541
  %v558 = vmul.f32 %v366, %v542
  %v559 = vmul.f32 %v367, %v543
  %v560 = vmul.f32 %v368, %v544
  %v561 = vmul.f32 %v369, %v545
  %v562 = vmul.f32 %v370, %v546
  %v563 = vmul.f32 %v371, %v547
  %v564 = vpack.c.bf16 %v549, %v548
  %v565 = vpack.c.bf16 %v551, %v550
  %v566 = vpack.c.bf16 %v553, %v552
  %v567 = vpack.c.bf16 %v555, %v554
  %v568 = vpack.c.bf16 %v557, %v556
  %v569 = vpack.c.bf16 %v559, %v558
  %v570 = vpack.c.bf16 %v561, %v560
  %v571 = vpack.c.bf16 %v563, %v562
  %v580 = vunpack.c.l.b16 %v564
  %v581 = vunpack.c.h.b16 %v564
  %v582 = vunpack.c.l.b16 %v565
  %v583 = vunpack.c.h.b16 %v565
  %v584 = vunpack.c.l.b16 %v566
  %v585 = vunpack.c.h.b16 %v566
  %v586 = vunpack.c.l.b16 %v567
  %v587 = vunpack.c.h.b16 %v567
  %v588 = vunpack.c.l.b16 %v568
  %v589 = vunpack.c.h.b16 %v568
  %v590 = vunpack.c.l.b16 %v569
  %v591 = vunpack.c.h.b16 %v569
  %v592 = vunpack.c.l.b16 %v570
  %v593 = vunpack.c.h.b16 %v570
  %v594 = vunpack.c.l.b16 %v571
  %v595 = vunpack.c.h.b16 %v571
  %v596 = vpack.c.b16 %v580, %v580
  %v597 = vpack.c.b16 %v581, %v581
  %v598 = vpack.c.b16 %v582, %v582
  %v599 = vpack.c.b16 %v583, %v583
  %v600 = vpack.c.b16 %v584, %v584
  %v601 = vpack.c.b16 %v585, %v585
  %v602 = vpack.c.b16 %v586, %v586
  %v603 = vpack.c.b16 %v587, %v587
  %v604 = vpack.c.b16 %v588, %v588
  %v605 = vpack.c.b16 %v589, %v589
  %v606 = vpack.c.b16 %v590, %v590
  %v607 = vpack.c.b16 %v591, %v591
  %v608 = vpack.c.b16 %v592, %v592
  %v609 = vpack.c.b16 %v593, %v593
  %v610 = vpack.c.b16 %v594, %v594
  %v611 = vpack.c.b16 %v595, %v595
  %628 = vst [vmem:[%s6] sm:$0xf] %v596
  %629 = vst [vmem:[%s6 + $0x4] sm:$0xf] %v597
  %630 = vst [vmem:[%s6 + $0x8] sm:$0xf] %v598
  %631 = vst [vmem:[%s6 + $0xc] sm:$0xf] %v599
  %632 = vst [vmem:[%s6 + $0x10] sm:$0xf] %v600
  %633 = vst [vmem:[%s6 + $0x14] sm:$0xf] %v601
  %634 = vst [vmem:[%s6 + $0x18] sm:$0xf] %v602
  %635 = vst [vmem:[%s6 + $0x1c] sm:$0xf] %v603
  %636 = vst [vmem:[%s6 + $0x20] sm:$0xf] %v604
  %637 = vst [vmem:[%s6 + $0x24] sm:$0xf] %v605
  %638 = vst [vmem:[%s6 + $0x28] sm:$0xf] %v606
  %639 = vst [vmem:[%s6 + $0x2c] sm:$0xf] %v607
  %640 = vst [vmem:[%s6 + $0x30] sm:$0xf] %v608
  %641 = vst [vmem:[%s6 + $0x34] sm:$0xf] %v609
  %642 = vst [vmem:[%s6 + $0x38] sm:$0xf] %v610
  %643 = vst [vmem:[%s6 + $0x3c] sm:$0xf] %v611
  // Predicated region
  $region18: #{_lambda_.6} parent=0 // pred_check
    _
  $region19: #{_lambda_.6} parent=0 // pred_check_branch
    %645 = sbr.rel (0) target = $region21
  $region20: #{_lambda_.6} parent=0 // pred_region
    _
  $region21: #{_lambda_.6} parent=0 // pred_fallthru
    _
  // Predicated region
  $region22: #{_lambda_.6} parent=0 // pred_check
    _
  $region23: #{_lambda_.6} parent=0 // pred_check_branch
    %647 = sbr.rel (0) target = $region25
  $region24: #{_lambda_.6} parent=0 // pred_region
    _
  $region25: #{_lambda_.6} parent=0 // pred_fallthru
    _
  // Predicated region
  $region26: #{_lambda_.6} parent=0 // pred_check
    _
  $region27: #{_lambda_.6} parent=0 // pred_check_branch
    %649 = sbr.rel (0) target = $region29
  $region28: #{_lambda_.6} parent=0 // pred_region
    _
  $region29: #{_lambda_.6} parent=0 // pred_fallthru
    _
  // Predicated region
  $region30: #{_lambda_.6} parent=0 // pred_check
    _
  $region31: #{_lambda_.6} parent=0 // pred_check_branch
    %651 = sbr.rel (0) target = $region33
  $region32: #{_lambda_.6} parent=0 // pred_region
    _
  $region33: #{_lambda_.6} parent=0 // pred_fallthru
    _
  // Predicated region
  $region34: #{_lambda_.6} parent=0 // pred_check
    _
  $region35: #{_lambda_.6} parent=0 // pred_check_branch
    %653 = sbr.rel (0) target = $region37
  $region36: #{_lambda_.6} parent=0 // pred_region
    _
  $region37: #{_lambda_.6} parent=0 // pred_fallthru
    _
  // Predicated region
  $region38: #{_lambda_.6} parent=0 // pred_check
    _
  $region39: #{_lambda_.6} parent=0 // pred_check_branch
    %655 = sbr.rel (0) target = $region41
  $region40: #{_lambda_.6} parent=0 // pred_region
    _
  $region41: #{_lambda_.6} parent=0 // pred_fallthru
    _

// kernel: _lambda_.7
$region0: #{_lambda_.7}
  #allocation0 [shape = 'u32[]', space=smem, size = 0x4, offset = 0x4, fixed_abs, tag = 'smem constant byte address 0x4 - core index']
  #allocation1 [shape = 'u32[144,128]{1,0:T(1,128)}', space=vmem, size = 0x12000, scoped, tag = 'internal scratch']
  %s0 = inlined_call_operand.vmem [shape: bf16[128,128], index: 0, kind: input, shape index: {}]
  %s1 = inlined_call_operand.vmem [shape: bf16[128,128], index: 1, kind: input, shape index: {}]
  %s2 = inlined_call_operand.vmem [shape: f32[1,128], index: 2, kind: input, shape index: {}]
  %s3 = inlined_call_operand.vmem [shape: f32[1,128], index: 3, kind: input, shape index: {}]
  %s4 = inlined_call_operand.vmem [shape: bf16[128,128], index: 4, kind: input, shape index: {}]
  %s5 = inlined_call_operand.vmem [shape: f32[1,128], index: 5, kind: input, shape index: {}]
  %s6 = inlined_call_operand.vmem [shape: f32[1,128], index: 6, kind: input, shape index: {}]
  %s7 = inlined_call_operand.vmem [shape: bf16[128,128], index: 7, kind: output, shape index: {}]
  %s8 = sld [smem:[#allocation0]]
  $region38: #{_lambda_.7} parent=0
    _
  %s10 = ssub.s32 1, %s8
  %s11 = scalar_select 0, %s10, %s8
  // Predicated region
  $region2: #{_lambda_.7} parent=0 // pred_check
    _
  $region3: #{_lambda_.7} parent=0 // pred_check_branch
    %13 = sbr.rel (0) target = $region5
  $region4: #{_lambda_.7} parent=0 // pred_region
    _
  $region5: #{_lambda_.7} parent=0 // pred_fallthru
    _
  // Predicated region
  $region6: #{_lambda_.7} parent=0 // pred_check
    _
  $region7: #{_lambda_.7} parent=0 // pred_check_branch
    %15 = sbr.rel (0) target = $region9
  $region8: #{_lambda_.7} parent=0 // pred_region
    _
  $region9: #{_lambda_.7} parent=0 // pred_fallthru
    _
  // Predicated region
  $region10: #{_lambda_.7} parent=0 // pred_check
    _
  $region11: #{_lambda_.7} parent=0 // pred_check_branch
    %17 = sbr.rel (0) target = $region13
  $region12: #{_lambda_.7} parent=0 // pred_region
    _
  $region13: #{_lambda_.7} parent=0 // pred_fallthru
    _
  // Predicated region
  $region14: #{_lambda_.7} parent=0 // pred_check
    _
  $region15: #{_lambda_.7} parent=0 // pred_check_branch
    %19 = sbr.rel (0) target = $region17
  $region16: #{_lambda_.7} parent=0 // pred_region
    _
  $region17: #{_lambda_.7} parent=0 // pred_fallthru
    _
  // Predicated region
  $region18: #{_lambda_.7} parent=0 // pred_check
    _
  $region19: #{_lambda_.7} parent=0 // pred_check_branch
    %21 = sbr.rel (0) target = $region21
  $region20: #{_lambda_.7} parent=0 // pred_region
    _
  $region21: #{_lambda_.7} parent=0 // pred_fallthru
    _
  // Predicated region
  $region22: #{_lambda_.7} parent=0 // pred_check
    _
  $region23: #{_lambda_.7} parent=0 // pred_check_branch
    %23 = sbr.rel (0) target = $region25
  $region24: #{_lambda_.7} parent=0 // pred_region
    _
  $region25: #{_lambda_.7} parent=0 // pred_fallthru
    _
  // Predicated region
  $region26: #{_lambda_.7} parent=0 // pred_check
    _
  $region27: #{_lambda_.7} parent=0 // pred_check_branch
    %25 = sbr.rel (0) target = $region29
  $region28: #{_lambda_.7} parent=0 // pred_region
    _
  $region29: #{_lambda_.7} parent=0 // pred_fallthru
    _
  %v27 = vld [vmem:[%s0] sm:$0xf]
  %v28 = vld [vmem:[%s0 + $0x4] sm:$0xf]
  %v29 = vld [vmem:[%s0 + $0x8] sm:$0xf]
  %v30 = vld [vmem:[%s0 + $0xc] sm:$0xf]
  %v31 = vld [vmem:[%s0 + $0x10] sm:$0xf]
  %v32 = vld [vmem:[%s0 + $0x14] sm:$0xf]
  %v33 = vld [vmem:[%s0 + $0x18] sm:$0xf]
  %v34 = vld [vmem:[%s0 + $0x1c] sm:$0xf]
  %v35 = vld [vmem:[%s0 + $0x20] sm:$0xf]
  %v36 = vld [vmem:[%s0 + $0x24] sm:$0xf]
  %v37 = vld [vmem:[%s0 + $0x28] sm:$0xf]
  %v38 = vld [vmem:[%s0 + $0x2c] sm:$0xf]
  %v39 = vld [vmem:[%s0 + $0x30] sm:$0xf]
  %v40 = vld [vmem:[%s0 + $0x34] sm:$0xf]
  %v41 = vld [vmem:[%s0 + $0x38] sm:$0xf]
  %v42 = vld [vmem:[%s0 + $0x3c] sm:$0xf]
  %v43 = vld [vmem:[%s1] sm:$0xf]
  %v44 = vld [vmem:[%s1 + $0x4] sm:$0xf]
  %v45 = vld [vmem:[%s1 + $0x8] sm:$0xf]
  %v46 = vld [vmem:[%s1 + $0xc] sm:$0xf]
  %v47 = vld [vmem:[%s1 + $0x10] sm:$0xf]
  %v48 = vld [vmem:[%s1 + $0x14] sm:$0xf]
  %v49 = vld [vmem:[%s1 + $0x18] sm:$0xf]
  %v50 = vld [vmem:[%s1 + $0x1c] sm:$0xf]
  %v51 = vld [vmem:[%s1 + $0x20] sm:$0xf]
  %v52 = vld [vmem:[%s1 + $0x24] sm:$0xf]
  %v53 = vld [vmem:[%s1 + $0x28] sm:$0xf]
  %v54 = vld [vmem:[%s1 + $0x2c] sm:$0xf]
  %v55 = vld [vmem:[%s1 + $0x30] sm:$0xf]
  %v56 = vld [vmem:[%s1 + $0x34] sm:$0xf]
  %v57 = vld [vmem:[%s1 + $0x38] sm:$0xf]
  %v58 = vld [vmem:[%s1 + $0x3c] sm:$0xf]
  %v75 = vunpack.c.l.b16 %v27
  %v76 = vunpack.c.l.b16 %v28
  %v77 = vunpack.c.l.b16 %v29
  %v78 = vunpack.c.l.b16 %v30
  %v79 = vunpack.c.l.b16 %v31
  %v80 = vunpack.c.l.b16 %v32
  %v81 = vunpack.c.l.b16 %v33
  %v82 = vunpack.c.l.b16 %v34
  %v83 = vunpack.c.l.b16 %v35
  %v84 = vunpack.c.l.b16 %v36
  %v85 = vunpack.c.l.b16 %v37
  %v86 = vunpack.c.l.b16 %v38
  %v87 = vunpack.c.l.b16 %v39
  %v88 = vunpack.c.l.b16 %v40
  %v89 = vunpack.c.l.b16 %v41
  %v90 = vunpack.c.l.b16 %v42
  %v91 = vpack.c.b16 %v76, %v75
  %v92 = vpack.c.b16 %v78, %v77
  %v93 = vpack.c.b16 %v80, %v79
  %v94 = vpack.c.b16 %v82, %v81
  %v95 = vpack.c.b16 %v84, %v83
  %v96 = vpack.c.b16 %v86, %v85
  %v97 = vpack.c.b16 %v88, %v87
  %v98 = vpack.c.b16 %v90, %v89
  %v123 = vunpack.c.l.b16 %v43
  %v124 = vunpack.c.l.b16 %v44
  %v125 = vunpack.c.l.b16 %v45
  %v126 = vunpack.c.l.b16 %v46
  %v127 = vunpack.c.l.b16 %v47
  %v128 = vunpack.c.l.b16 %v48
  %v129 = vunpack.c.l.b16 %v49
  %v130 = vunpack.c.l.b16 %v50
  %v131 = vunpack.c.l.b16 %v51
  %v132 = vunpack.c.l.b16 %v52
  %v133 = vunpack.c.l.b16 %v53
  %v134 = vunpack.c.l.b16 %v54
  %v135 = vunpack.c.l.b16 %v55
  %v136 = vunpack.c.l.b16 %v56
  %v137 = vunpack.c.l.b16 %v57
  %v138 = vunpack.c.l.b16 %v58
  %v139 = vpack.c.b16 %v124, %v123
  %v140 = vpack.c.b16 %v126, %v125
  %v141 = vpack.c.b16 %v128, %v127
  %v142 = vpack.c.b16 %v130, %v129
  %v143 = vpack.c.b16 %v132, %v131
  %v144 = vpack.c.b16 %v134, %v133
  %v145 = vpack.c.b16 %v136, %v135
  %v146 = vpack.c.b16 %v138, %v137
  %155 = vmatprep.subr.bf16.mxu0 0
  %156 = vmatpush1.bf16.msra.mxu0 %v139
  %157 = vmatprep.subr.bf16.mxu0 0
  %158 = vmatpush1.bf16.msra.mxu0 %v140
  %159 = vmatprep.subr.bf16.mxu0 0
  %160 = vmatpush1.bf16.msra.mxu0 %v141
  %161 = vmatprep.subr.bf16.mxu0 0
  %162 = vmatpush1.bf16.msra.mxu0 %v142
  %163 = vmatprep.subr.bf16.mxu0 0
  %164 = vmatpush1.bf16.msra.mxu0 %v143
  %165 = vmatprep.subr.bf16.mxu0 0
  %166 = vmatpush1.bf16.msra.mxu0 %v144
  %167 = vmatprep.subr.bf16.mxu0 0
  %168 = vmatpush1.bf16.msra.mxu0 %v145
  %169 = vmatprep.subr.bf16.mxu0 0
  %170 = vmatpush1.bf16.msra.mxu0 %v146
  %171 = vmatprep.subr.bf16.mxu0 0
  %172 = vmatpush1.bf16.msra.mxu0 0
  %173 = vmatprep.subr.bf16.mxu0 0
  %174 = vmatpush1.bf16.msra.mxu0 0
  %175 = vmatprep.subr.bf16.mxu0 0
  %176 = vmatpush1.bf16.msra.mxu0 0
  %177 = vmatprep.subr.bf16.mxu0 0
  %178 = vmatpush1.bf16.msra.mxu0 0
  %179 = vmatprep.subr.bf16.mxu0 0
  %180 = vmatpush1.bf16.msra.mxu0 0
  %181 = vmatprep.subr.bf16.mxu0 0
  %182 = vmatpush1.bf16.msra.mxu0 0
  %183 = vmatprep.subr.bf16.mxu0 0
  %184 = vmatpush1.bf16.msra.mxu0 0
  %185 = vmatprep.subr.bf16.mxu0 0
  %186 = vmatpush1.bf16.msra.mxu0 0
  %187 = vmatprep.mubr.bf16.mxu0 0
  %188 = vmatmul.mubr.bf16.gmra.mrb[0].mxu0 %v91
  %v189 = vpop.f32.mrb[0].mxu0
  %v190 = vadd.f32 0.0, %v189
  %v191 = vpop.f32.mrb[0].mxu0
  %v192 = vpop.f32.mrb[0].mxu0
  %v193 = vadd.f32 0.0, %v192
  %v194 = vpop.f32.mrb[0].mxu0
  %195 = vmatprep.mubr.bf16.mxu0 0
  %196 = vmatmul.mubr.bf16.gmra.mrb[0].mxu0 %v92
  %v197 = vpop.f32.mrb[0].mxu0
  %v198 = vadd.f32 0.0, %v197
  %v199 = vpop.f32.mrb[0].mxu0
  %v200 = vpop.f32.mrb[0].mxu0
  %v201 = vadd.f32 0.0, %v200
  %v202 = vpop.f32.mrb[0].mxu0
  %203 = vmatprep.mubr.bf16.mxu0 0
  %204 = vmatmul.mubr.bf16.gmra.mrb[0].mxu0 %v93
  %v205 = vpop.f32.mrb[0].mxu0
  %v206 = vadd.f32 0.0, %v205
  %v207 = vpop.f32.mrb[0].mxu0
  %v208 = vpop.f32.mrb[0].mxu0
  %v209 = vadd.f32 0.0, %v208
  %v210 = vpop.f32.mrb[0].mxu0
  %211 = vmatprep.mubr.bf16.mxu0 0
  %212 = vmatmul.mubr.bf16.gmra.mrb[0].mxu0 %v94
  %v213 = vpop.f32.mrb[0].mxu0
  %v214 = vadd.f32 0.0, %v213
  %v215 = vpop.f32.mrb[0].mxu0
  %v216 = vpop.f32.mrb[0].mxu0
  %v217 = vadd.f32 0.0, %v216
  %v218 = vpop.f32.mrb[0].mxu0
  %219 = vmatprep.mubr.bf16.mxu0 0
  %220 = vmatmul.mubr.bf16.gmra.mrb[0].mxu0 %v95
  %v221 = vpop.f32.mrb[0].mxu0
  %v222 = vadd.f32 0.0, %v221
  %v223 = vpop.f32.mrb[0].mxu0
  %v224 = vpop.f32.mrb[0].mxu0
  %v225 = vadd.f32 0.0, %v224
  %v226 = vpop.f32.mrb[0].mxu0
  %227 = vmatprep.mubr.bf16.mxu0 0
  %228 = vmatmul.mubr.bf16.gmra.mrb[0].mxu0 %v96
  %v229 = vpop.f32.mrb[0].mxu0
  %v230 = vadd.f32 0.0, %v229
  %v231 = vpop.f32.mrb[0].mxu0
  %v232 = vpop.f32.mrb[0].mxu0
  %v233 = vadd.f32 0.0, %v232
  %v234 = vpop.f32.mrb[0].mxu0
  %235 = vmatprep.mubr.bf16.mxu0 0
  %236 = vmatmul.mubr.bf16.gmra.mrb[0].mxu0 %v97
  %v237 = vpop.f32.mrb[0].mxu0
  %v238 = vadd.f32 0.0, %v237
  %v239 = vpop.f32.mrb[0].mxu0
  %v240 = vpop.f32.mrb[0].mxu0
  %v241 = vadd.f32 0.0, %v240
  %v242 = vpop.f32.mrb[0].mxu0
  %243 = vmatprep.mubr.bf16.mxu0 0
  %244 = vmatmul.mubr.bf16.gmra.mrb[0].mxu0 %v98
  %v245 = vpop.f32.mrb[0].mxu0
  %v246 = vadd.f32 0.0, %v245
  %v247 = vpop.f32.mrb[0].mxu0
  %v248 = vpop.f32.mrb[0].mxu0
  %v249 = vadd.f32 0.0, %v248
  %v250 = vpop.f32.mrb[0].mxu0
  %251 = vdwg.mxu0
  %v252 = vld [vmem:[%s2] sm:$0x1]
  %v254 = vlaneseq
  %v255 = vshrl.u32 %v254, 7
  %v256 = vsub.s32 0, %v255
  %v257 = vrot.slane %v252, %v256
  %v259 = vmul.f32 %v190, %v257
  %v260 = vmul.f32 %v193, %v257
  %v261 = vmul.f32 %v198, %v257
  %v262 = vmul.f32 %v201, %v257
  %v263 = vmul.f32 %v206, %v257
  %v264 = vmul.f32 %v209, %v257
  %v265 = vmul.f32 %v214, %v257
  %v266 = vmul.f32 %v217, %v257
  %v267 = vmul.f32 %v222, %v257
  %v268 = vmul.f32 %v225, %v257
  %v269 = vmul.f32 %v230, %v257
  %v270 = vmul.f32 %v233, %v257
  %v271 = vmul.f32 %v238, %v257
  %v272 = vmul.f32 %v241, %v257
  %v273 = vmul.f32 %v246, %v257
  %v274 = vmul.f32 %v249, %v257
  %v275 = vld [vmem:[%s3] sm:$0x1]
  %v277 = vlaneseq
  %v278 = vshrl.u32 %v277, 7
  %v279 = vsub.s32 0, %v278
  %v280 = vrot.slane %v275, %v279
  %v282 = vadd.f32 %v259, %v280
  %v283 = vadd.f32 %v260, %v280
  %v284 = vadd.f32 %v261, %v280
  %v285 = vadd.f32 %v262, %v280
  %v286 = vadd.f32 %v263, %v280
  %v287 = vadd.f32 %v264, %v280
  %v288 = vadd.f32 %v265, %v280
  %v289 = vadd.f32 %v266, %v280
  %v290 = vadd.f32 %v267, %v280
  %v291 = vadd.f32 %v268, %v280
  %v292 = vadd.f32 %v269, %v280
  %v293 = vadd.f32 %v270, %v280
  %v294 = vadd.f32 %v271, %v280
  %v295 = vadd.f32 %v272, %v280
  %v296 = vadd.f32 %v273, %v280
  %v297 = vadd.f32 %v274, %v280
  %v298 = vsub.f32 0.0, %v282
  %v299 = vsub.f32 0.0, %v283
  %v300 = vsub.f32 0.0, %v284
  %v301 = vsub.f32 0.0, %v285
  %v302 = vsub.f32 0.0, %v286
  %v303 = vsub.f32 0.0, %v287
  %v304 = vsub.f32 0.0, %v288
  %v305 = vsub.f32 0.0, %v289
  %v306 = vsub.f32 0.0, %v290
  %v307 = vsub.f32 0.0, %v291
  %v308 = vsub.f32 0.0, %v292
  %v309 = vsub.f32 0.0, %v293
  %v310 = vsub.f32 0.0, %v294
  %v311 = vsub.f32 0.0, %v295
  %v312 = vsub.f32 0.0, %v296
  %v313 = vsub.f32 0.0, %v297
  %v314 = vmin.f32 %v298, 80.0
  %v315 = vmin.f32 %v299, 80.0
  %v316 = vmin.f32 %v300, 80.0
  %v317 = vmin.f32 %v301, 80.0
  %v318 = vmin.f32 %v302, 80.0
  %v319 = vmin.f32 %v303, 80.0
  %v320 = vmin.f32 %v304, 80.0
  %v321 = vmin.f32 %v305, 80.0
  %v322 = vmin.f32 %v306, 80.0
  %v323 = vmin.f32 %v307, 80.0
  %v324 = vmin.f32 %v308, 80.0
  %v325 = vmin.f32 %v309, 80.0
  %v326 = vmin.f32 %v310, 80.0
  %v327 = vmin.f32 %v311, 80.0
  %v328 = vmin.f32 %v312, 80.0
  %v329 = vmin.f32 %v313, 80.0
  %v330 = vmul.f32 %v314, 1.442695
  %v331 = vpow.pop %v330
  %v332 = vmul.f32 %v315, 1.442695
  %v333 = vpow.pop %v332
  %v334 = vmul.f32 %v316, 1.442695
  %v335 = vpow.pop %v334
  %v336 = vmul.f32 %v317, 1.442695
  %v337 = vpow.pop %v336
  %v338 = vmul.f32 %v318, 1.442695
  %v339 = vpow.pop %v338
  %v340 = vmul.f32 %v319, 1.442695
  %v341 = vpow.pop %v340
  %v342 = vmul.f32 %v320, 1.442695
  %v343 = vpow.pop %v342
  %v344 = vmul.f32 %v321, 1.442695
  %v345 = vpow.pop %v344
  %v346 = vmul.f32 %v322, 1.442695
  %v347 = vpow.pop %v346
  %v348 = vmul.f32 %v323, 1.442695
  %v349 = vpow.pop %v348
  %v350 = vmul.f32 %v324, 1.442695
  %v351 = vpow.pop %v350
  %v352 = vmul.f32 %v325, 1.442695
  %v353 = vpow.pop %v352
  %v354 = vmul.f32 %v326, 1.442695
  %v355 = vpow.pop %v354
  %v356 = vmul.f32 %v327, 1.442695
  %v357 = vpow.pop %v356
  %v358 = vmul.f32 %v328, 1.442695
  %v359 = vpow.pop %v358
  %v360 = vmul.f32 %v329, 1.442695
  %v361 = vpow.pop %v360
  %v362 = vadd.f32 %v331, 1.0
  %v363 = vadd.f32 %v333, 1.0
  %v364 = vadd.f32 %v335, 1.0
  %v365 = vadd.f32 %v337, 1.0
  %v366 = vadd.f32 %v339, 1.0
  %v367 = vadd.f32 %v341, 1.0
  %v368 = vadd.f32 %v343, 1.0
  %v369 = vadd.f32 %v345, 1.0
  %v370 = vadd.f32 %v347, 1.0
  %v371 = vadd.f32 %v349, 1.0
  %v372 = vadd.f32 %v351, 1.0
  %v373 = vadd.f32 %v353, 1.0
  %v374 = vadd.f32 %v355, 1.0
  %v375 = vadd.f32 %v357, 1.0
  %v376 = vadd.f32 %v359, 1.0
  %v377 = vadd.f32 %v361, 1.0
  %v378 = vrcp.pop %v362
  %v379 = vrcp.pop %v363
  %v380 = vrcp.pop %v364
  %v381 = vrcp.pop %v365
  %v382 = vrcp.pop %v366
  %v383 = vrcp.pop %v367
  %v384 = vrcp.pop %v368
  %v385 = vrcp.pop %v369
  %v386 = vrcp.pop %v370
  %v387 = vrcp.pop %v371
  %v388 = vrcp.pop %v372
  %v389 = vrcp.pop %v373
  %v390 = vrcp.pop %v374
  %v391 = vrcp.pop %v375
  %v392 = vrcp.pop %v376
  %v393 = vrcp.pop %v377
  %v394 = vmul.f32 %v282, %v378
  %v395 = vmul.f32 %v283, %v379
  %v396 = vmul.f32 %v284, %v380
  %v397 = vmul.f32 %v285, %v381
  %v398 = vmul.f32 %v286, %v382
  %v399 = vmul.f32 %v287, %v383
  %v400 = vmul.f32 %v288, %v384
  %v401 = vmul.f32 %v289, %v385
  %v402 = vmul.f32 %v290, %v386
  %v403 = vmul.f32 %v291, %v387
  %v404 = vmul.f32 %v292, %v388
  %v405 = vmul.f32 %v293, %v389
  %v406 = vmul.f32 %v294, %v390
  %v407 = vmul.f32 %v295, %v391
  %v408 = vmul.f32 %v296, %v392
  %v409 = vmul.f32 %v297, %v393
  %v410 = vpack.c.bf16 %v395, %v394
  %v411 = vpack.c.bf16 %v397, %v396
  %v412 = vpack.c.bf16 %v399, %v398
  %v413 = vpack.c.bf16 %v401, %v400
  %v414 = vpack.c.bf16 %v403, %v402
  %v415 = vpack.c.bf16 %v405, %v404
  %v416 = vpack.c.bf16 %v407, %v406
  %v417 = vpack.c.bf16 %v409, %v408
  %v418 = vld [vmem:[%s4] sm:$0xf]
  %v419 = vld [vmem:[%s4 + $0x4] sm:$0xf]
  %v420 = vld [vmem:[%s4 + $0x8] sm:$0xf]
  %v421 = vld [vmem:[%s4 + $0xc] sm:$0xf]
  %v422 = vld [vmem:[%s4 + $0x10] sm:$0xf]
  %v423 = vld [vmem:[%s4 + $0x14] sm:$0xf]
  %v424 = vld [vmem:[%s4 + $0x18] sm:$0xf]
  %v425 = vld [vmem:[%s4 + $0x1c] sm:$0xf]
  %v426 = vld [vmem:[%s4 + $0x20] sm:$0xf]
  %v427 = vld [vmem:[%s4 + $0x24] sm:$0xf]
  %v428 = vld [vmem:[%s4 + $0x28] sm:$0xf]
  %v429 = vld [vmem:[%s4 + $0x2c] sm:$0xf]
  %v430 = vld [vmem:[%s4 + $0x30] sm:$0xf]
  %v431 = vld [vmem:[%s4 + $0x34] sm:$0xf]
  %v432 = vld [vmem:[%s4 + $0x38] sm:$0xf]
  %v433 = vld [vmem:[%s4 + $0x3c] sm:$0xf]
  %v450 = vunpack.c.l.b16 %v418
  %v451 = vunpack.c.l.b16 %v419
  %v452 = vunpack.c.l.b16 %v420
  %v453 = vunpack.c.l.b16 %v421
  %v454 = vunpack.c.l.b16 %v422
  %v455 = vunpack.c.l.b16 %v423
  %v456 = vunpack.c.l.b16 %v424
  %v457 = vunpack.c.l.b16 %v425
  %v458 = vunpack.c.l.b16 %v426
  %v459 = vunpack.c.l.b16 %v427
  %v460 = vunpack.c.l.b16 %v428
  %v461 = vunpack.c.l.b16 %v429
  %v462 = vunpack.c.l.b16 %v430
  %v463 = vunpack.c.l.b16 %v431
  %v464 = vunpack.c.l.b16 %v432
  %v465 = vunpack.c.l.b16 %v433
  %v466 = vpack.c.b16 %v451, %v450
  %v467 = vpack.c.b16 %v453, %v452
  %v468 = vpack.c.b16 %v455, %v454
  %v469 = vpack.c.b16 %v457, %v456
  %v470 = vpack.c.b16 %v459, %v458
  %v471 = vpack.c.b16 %v461, %v460
  %v472 = vpack.c.b16 %v463, %v462
  %v473 = vpack.c.b16 %v465, %v464
  %482 = vmatprep.subr.bf16.mxu0 0
  %483 = vmatpush1.bf16.msra.mxu0 %v466
  %484 = vmatprep.subr.bf16.mxu0 0
  %485 = vmatpush1.bf16.msra.mxu0 %v467
  %486 = vmatprep.subr.bf16.mxu0 0
  %487 = vmatpush1.bf16.msra.mxu0 %v468
  %488 = vmatprep.subr.bf16.mxu0 0
  %489 = vmatpush1.bf16.msra.mxu0 %v469
  %490 = vmatprep.subr.bf16.mxu0 0
  %491 = vmatpush1.bf16.msra.mxu0 %v470
  %492 = vmatprep.subr.bf16.mxu0 0
  %493 = vmatpush1.bf16.msra.mxu0 %v471
  %494 = vmatprep.subr.bf16.mxu0 0
  %495 = vmatpush1.bf16.msra.mxu0 %v472
  %496 = vmatprep.subr.bf16.mxu0 0
  %497 = vmatpush1.bf16.msra.mxu0 %v473
  %498 = vmatprep.subr.bf16.mxu0 0
  %499 = vmatpush1.bf16.msra.mxu0 0
  %500 = vmatprep.subr.bf16.mxu0 0
  %501 = vmatpush1.bf16.msra.mxu0 0
  %502 = vmatprep.subr.bf16.mxu0 0
  %503 = vmatpush1.bf16.msra.mxu0 0
  %504 = vmatprep.subr.bf16.mxu0 0
  %505 = vmatpush1.bf16.msra.mxu0 0
  %506 = vmatprep.subr.bf16.mxu0 0
  %507 = vmatpush1.bf16.msra.mxu0 0
  %508 = vmatprep.subr.bf16.mxu0 0
  %509 = vmatpush1.bf16.msra.mxu0 0
  %510 = vmatprep.subr.bf16.mxu0 0
  %511 = vmatpush1.bf16.msra.mxu0 0
  %512 = vmatprep.subr.bf16.mxu0 0
  %513 = vmatpush1.bf16.msra.mxu0 0
  %514 = vmatprep.mubr.bf16.mxu0 0
  %515 = vmatmul.mubr.bf16.gmra.mrb[0].mxu0 %v410
  %v516 = vpop.f32.mrb[0].mxu0
  %v517 = vadd.f32 0.0, %v516
  %v518 = vpop.f32.mrb[0].mxu0
  %v519 = vpop.f32.mrb[0].mxu0
  %v520 = vadd.f32 0.0, %v519
  %v521 = vpop.f32.mrb[0].mxu0
  %522 = vmatprep.mubr.bf16.mxu0 0
  %523 = vmatmul.mubr.bf16.gmra.mrb[0].mxu0 %v411
  %v524 = vpop.f32.mrb[0].mxu0
  %v525 = vadd.f32 0.0, %v524
  %v526 = vpop.f32.mrb[0].mxu0
  %v527 = vpop.f32.mrb[0].mxu0
  %v528 = vadd.f32 0.0, %v527
  %v529 = vpop.f32.mrb[0].mxu0
  %530 = vmatprep.mubr.bf16.mxu0 0
  %531 = vmatmul.mubr.bf16.gmra.mrb[0].mxu0 %v412
  %v532 = vpop.f32.mrb[0].mxu0
  %v533 = vadd.f32 0.0, %v532
  %v534 = vpop.f32.mrb[0].mxu0
  %v535 = vpop.f32.mrb[0].mxu0
  %v536 = vadd.f32 0.0, %v535
  %v537 = vpop.f32.mrb[0].mxu0
  %538 = vmatprep.mubr.bf16.mxu0 0
  %539 = vmatmul.mubr.bf16.gmra.mrb[0].mxu0 %v413
  %v540 = vpop.f32.mrb[0].mxu0
  %v541 = vadd.f32 0.0, %v540
  %v542 = vpop.f32.mrb[0].mxu0
  %v543 = vpop.f32.mrb[0].mxu0
  %v544 = vadd.f32 0.0, %v543
  %v545 = vpop.f32.mrb[0].mxu0
  %546 = vmatprep.mubr.bf16.mxu0 0
  %547 = vmatmul.mubr.bf16.gmra.mrb[0].mxu0 %v414
  %v548 = vpop.f32.mrb[0].mxu0
  %v549 = vadd.f32 0.0, %v548
  %v550 = vpop.f32.mrb[0].mxu0
  %v551 = vpop.f32.mrb[0].mxu0
  %v552 = vadd.f32 0.0, %v551
  %v553 = vpop.f32.mrb[0].mxu0
  %554 = vmatprep.mubr.bf16.mxu0 0
  %555 = vmatmul.mubr.bf16.gmra.mrb[0].mxu0 %v415
  %v556 = vpop.f32.mrb[0].mxu0
  %v557 = vadd.f32 0.0, %v556
  %v558 = vpop.f32.mrb[0].mxu0
  %v559 = vpop.f32.mrb[0].mxu0
  %v560 = vadd.f32 0.0, %v559
  %v561 = vpop.f32.mrb[0].mxu0
  %562 = vmatprep.mubr.bf16.mxu0 0
  %563 = vmatmul.mubr.bf16.gmra.mrb[0].mxu0 %v416
  %v564 = vpop.f32.mrb[0].mxu0
  %v565 = vadd.f32 0.0, %v564
  %v566 = vpop.f32.mrb[0].mxu0
  %v567 = vpop.f32.mrb[0].mxu0
  %v568 = vadd.f32 0.0, %v567
  %v569 = vpop.f32.mrb[0].mxu0
  %570 = vmatprep.mubr.bf16.mxu0 0
  %571 = vmatmul.mubr.bf16.gmra.mrb[0].mxu0 %v417
  %v572 = vpop.f32.mrb[0].mxu0
  %v573 = vadd.f32 0.0, %v572
  %v574 = vpop.f32.mrb[0].mxu0
  %v575 = vpop.f32.mrb[0].mxu0
  %v576 = vadd.f32 0.0, %v575
  %v577 = vpop.f32.mrb[0].mxu0
  %578 = vdwg.mxu0
  %v579 = vld [vmem:[%s5] sm:$0x1]
  %v581 = vlaneseq
  %v582 = vshrl.u32 %v581, 7
  %v583 = vsub.s32 0, %v582
  %v584 = vrot.slane %v579, %v583
  %v586 = vmul.f32 %v517, %v584
  %v587 = vmul.f32 %v520, %v584
  %v588 = vmul.f32 %v525, %v584
  %v589 = vmul.f32 %v528, %v584
  %v590 = vmul.f32 %v533, %v584
  %v591 = vmul.f32 %v536, %v584
  %v592 = vmul.f32 %v541, %v584
  %v593 = vmul.f32 %v544, %v584
  %v594 = vmul.f32 %v549, %v584
  %v595 = vmul.f32 %v552, %v584
  %v596 = vmul.f32 %v557, %v584
  %v597 = vmul.f32 %v560, %v584
  %v598 = vmul.f32 %v565, %v584
  %v599 = vmul.f32 %v568, %v584
  %v600 = vmul.f32 %v573, %v584
  %v601 = vmul.f32 %v576, %v584
  %v602 = vld [vmem:[%s6] sm:$0x1]
  %v604 = vlaneseq
  %v605 = vshrl.u32 %v604, 7
  %v606 = vsub.s32 0, %v605
  %v607 = vrot.slane %v602, %v606
  %v609 = vadd.f32 %v586, %v607
  %v610 = vadd.f32 %v587, %v607
  %v611 = vadd.f32 %v588, %v607
  %v612 = vadd.f32 %v589, %v607
  %v613 = vadd.f32 %v590, %v607
  %v614 = vadd.f32 %v591, %v607
  %v615 = vadd.f32 %v592, %v607
  %v616 = vadd.f32 %v593, %v607
  %v617 = vadd.f32 %v594, %v607
  %v618 = vadd.f32 %v595, %v607
  %v619 = vadd.f32 %v596, %v607
  %v620 = vadd.f32 %v597, %v607
  %v621 = vadd.f32 %v598, %v607
  %v622 = vadd.f32 %v599, %v607
  %v623 = vadd.f32 %v600, %v607
  %v624 = vadd.f32 %v601, %v607
  %v625 = vpack.c.bf16 %v610, %v609
  %v626 = vpack.c.bf16 %v612, %v611
  %v627 = vpack.c.bf16 %v614, %v613
  %v628 = vpack.c.bf16 %v616, %v615
  %v629 = vpack.c.bf16 %v618, %v617
  %v630 = vpack.c.bf16 %v620, %v619
  %v631 = vpack.c.bf16 %v622, %v621
  %v632 = vpack.c.bf16 %v624, %v623
  %v641 = vunpack.c.l.b16 %v625
  %v642 = vunpack.c.h.b16 %v625
  %v643 = vunpack.c.l.b16 %v626
  %v644 = vunpack.c.h.b16 %v626
  %v645 = vunpack.c.l.b16 %v627
  %v646 = vunpack.c.h.b16 %v627
  %v647 = vunpack.c.l.b16 %v628
  %v648 = vunpack.c.h.b16 %v628
  %v649 = vunpack.c.l.b16 %v629
  %v650 = vunpack.c.h.b16 %v629
  %v651 = vunpack.c.l.b16 %v630
  %v652 = vunpack.c.h.b16 %v630
  %v653 = vunpack.c.l.b16 %v631
  %v654 = vunpack.c.h.b16 %v631
  %v655 = vunpack.c.l.b16 %v632
  %v656 = vunpack.c.h.b16 %v632
  %v657 = vpack.c.b16 %v641, %v641
  %v658 = vpack.c.b16 %v642, %v642
  %v659 = vpack.c.b16 %v643, %v643
  %v660 = vpack.c.b16 %v644, %v644
  %v661 = vpack.c.b16 %v645, %v645
  %v662 = vpack.c.b16 %v646, %v646
  %v663 = vpack.c.b16 %v647, %v647
  %v664 = vpack.c.b16 %v648, %v648
  %v665 = vpack.c.b16 %v649, %v649
  %v666 = vpack.c.b16 %v650, %v650
  %v667 = vpack.c.b16 %v651, %v651
  %v668 = vpack.c.b16 %v652, %v652
  %v669 = vpack.c.b16 %v653, %v653
  %v670 = vpack.c.b16 %v654, %v654
  %v671 = vpack.c.b16 %v655, %v655
  %v672 = vpack.c.b16 %v656, %v656
  %689 = vst [vmem:[%s7] sm:$0xf] %v657
  %690 = vst [vmem:[%s7 + $0x4] sm:$0xf] %v658
  %691 = vst [vmem:[%s7 + $0x8] sm:$0xf] %v659
  %692 = vst [vmem:[%s7 + $0xc] sm:$0xf] %v660
  %693 = vst [vmem:[%s7 + $0x10] sm:$0xf] %v661
  %694 = vst [vmem:[%s7 + $0x14] sm:$0xf] %v662
  %695 = vst [vmem:[%s7 + $0x18] sm:$0xf] %v663
  %696 = vst [vmem:[%s7 + $0x1c] sm:$0xf] %v664
  %697 = vst [vmem:[%s7 + $0x20] sm:$0xf] %v665
  %698 = vst [vmem:[%s7 + $0x24] sm:$0xf] %v666
  %699 = vst [vmem:[%s7 + $0x28] sm:$0xf] %v667
  %700 = vst [vmem:[%s7 + $0x2c] sm:$0xf] %v668
  %701 = vst [vmem:[%s7 + $0x30] sm:$0xf] %v669
  %702 = vst [vmem:[%s7 + $0x34] sm:$0xf] %v670
  %703 = vst [vmem:[%s7 + $0x38] sm:$0xf] %v671
  %704 = vst [vmem:[%s7 + $0x3c] sm:$0xf] %v672
  // Predicated region
  $region30: #{_lambda_.7} parent=0 // pred_check
    _
  $region31: #{_lambda_.7} parent=0 // pred_check_branch
    %706 = sbr.rel (0) target = $region33
  $region32: #{_lambda_.7} parent=0 // pred_region
    _
  $region33: #{_lambda_.7} parent=0 // pred_fallthru
    _
  // Predicated region
  $region34: #{_lambda_.7} parent=0 // pred_check
    _
  $region35: #{_lambda_.7} parent=0 // pred_check_branch
    %708 = sbr.rel (0) target = $region37
  $region36: #{_lambda_.7} parent=0 // pred_region
    _
  $region37: #{_lambda_.7} parent=0 // pred_fallthru
    _

// kernel: _lambda_.8
$region0: #{_lambda_.8}
  #allocation0 [shape = 'u32[]', space=smem, size = 0x4, offset = 0x4, fixed_abs, tag = 'smem constant byte address 0x4 - core index']
  #allocation1 [shape = 'u32[144,128]{1,0:T(1,128)}', space=vmem, size = 0x12000, scoped, tag = 'internal scratch']
  %s0 = inlined_call_operand.vmem [shape: bf16[32,256], index: 0, kind: input, shape index: {}]
  %s1 = inlined_call_operand.vmem [shape: bf16[256,128], index: 1, kind: input, shape index: {}]
  %s2 = inlined_call_operand.vmem [shape: f32[1,128], index: 2, kind: input, shape index: {}]
  %s3 = inlined_call_operand.vmem [shape: f32[1,128], index: 3, kind: input, shape index: {}]
  %s4 = inlined_call_operand.vmem [shape: bf16[128,128], index: 4, kind: input, shape index: {}]
  %s5 = inlined_call_operand.vmem [shape: f32[1,128], index: 5, kind: input, shape index: {}]
  %s6 = inlined_call_operand.vmem [shape: f32[1,128], index: 6, kind: input, shape index: {}]
  %s7 = inlined_call_operand.vmem [shape: bf16[32,128], index: 7, kind: output, shape index: {}]
  %s8 = sld [smem:[#allocation0]]
  $region38: #{_lambda_.8} parent=0
    _
  %s10 = ssub.s32 1, %s8
  %s11 = scalar_select 0, %s10, %s8
  // Predicated region
  $region2: #{_lambda_.8} parent=0 // pred_check
    _
  $region3: #{_lambda_.8} parent=0 // pred_check_branch
    %13 = sbr.rel (0) target = $region5
  $region4: #{_lambda_.8} parent=0 // pred_region
    _
  $region5: #{_lambda_.8} parent=0 // pred_fallthru
    _
  // Predicated region
  $region6: #{_lambda_.8} parent=0 // pred_check
    _
  $region7: #{_lambda_.8} parent=0 // pred_check_branch
    %15 = sbr.rel (0) target = $region9
  $region8: #{_lambda_.8} parent=0 // pred_region
    _
  $region9: #{_lambda_.8} parent=0 // pred_fallthru
    _
  // Predicated region
  $region10: #{_lambda_.8} parent=0 // pred_check
    _
  $region11: #{_lambda_.8} parent=0 // pred_check_branch
    %17 = sbr.rel (0) target = $region13
  $region12: #{_lambda_.8} parent=0 // pred_region
    _
  $region13: #{_lambda_.8} parent=0 // pred_fallthru
    _
  // Predicated region
  $region14: #{_lambda_.8} parent=0 // pred_check
    _
  $region15: #{_lambda_.8} parent=0 // pred_check_branch
    %19 = sbr.rel (0) target = $region17
  $region16: #{_lambda_.8} parent=0 // pred_region
    _
  $region17: #{_lambda_.8} parent=0 // pred_fallthru
    _
  // Predicated region
  $region18: #{_lambda_.8} parent=0 // pred_check
    _
  $region19: #{_lambda_.8} parent=0 // pred_check_branch
    %21 = sbr.rel (0) target = $region21
  $region20: #{_lambda_.8} parent=0 // pred_region
    _
  $region21: #{_lambda_.8} parent=0 // pred_fallthru
    _
  // Predicated region
  $region22: #{_lambda_.8} parent=0 // pred_check
    _
  $region23: #{_lambda_.8} parent=0 // pred_check_branch
    %23 = sbr.rel (0) target = $region25
  $region24: #{_lambda_.8} parent=0 // pred_region
    _
  $region25: #{_lambda_.8} parent=0 // pred_fallthru
    _
  // Predicated region
  $region26: #{_lambda_.8} parent=0 // pred_check
    _
  $region27: #{_lambda_.8} parent=0 // pred_check_branch
    %25 = sbr.rel (0) target = $region29
  $region28: #{_lambda_.8} parent=0 // pred_region
    _
  $region29: #{_lambda_.8} parent=0 // pred_fallthru
    _
  %v27 = vld [vmem:[%s0] sm:$0xff]
  %v28 = vld [vmem:[%s0 + $0x8] sm:$0xff]
  %v29 = vld [vmem:[%s0 + $0x10] sm:$0xff]
  %v30 = vld [vmem:[%s0 + $0x18] sm:$0xff]
  %v31 = vld [vmem:[%s1] sm:$0xf]
  %v32 = vld [vmem:[%s1 + $0x4] sm:$0xf]
  %v33 = vld [vmem:[%s1 + $0x8] sm:$0xf]
  %v34 = vld [vmem:[%s1 + $0xc] sm:$0xf]
  %v35 = vld [vmem:[%s1 + $0x10] sm:$0xf]
  %v36 = vld [vmem:[%s1 + $0x14] sm:$0xf]
  %v37 = vld [vmem:[%s1 + $0x18] sm:$0xf]
  %v38 = vld [vmem:[%s1 + $0x1c] sm:$0xf]
  %v39 = vld [vmem:[%s1 + $0x20] sm:$0xf]
  %v40 = vld [vmem:[%s1 + $0x24] sm:$0xf]
  %v41 = vld [vmem:[%s1 + $0x28] sm:$0xf]
  %v42 = vld [vmem:[%s1 + $0x2c] sm:$0xf]
  %v43 = vld [vmem:[%s1 + $0x30] sm:$0xf]
  %v44 = vld [vmem:[%s1 + $0x34] sm:$0xf]
  %v45 = vld [vmem:[%s1 + $0x38] sm:$0xf]
  %v46 = vld [vmem:[%s1 + $0x3c] sm:$0xf]
  %v47 = vld [vmem:[%s1 + $0x40] sm:$0xf]
  %v48 = vld [vmem:[%s1 + $0x44] sm:$0xf]
  %v49 = vld [vmem:[%s1 + $0x48] sm:$0xf]
  %v50 = vld [vmem:[%s1 + $0x4c] sm:$0xf]
  %v51 = vld [vmem:[%s1 + $0x50] sm:$0xf]
  %v52 = vld [vmem:[%s1 + $0x54] sm:$0xf]
  %v53 = vld [vmem:[%s1 + $0x58] sm:$0xf]
  %v54 = vld [vmem:[%s1 + $0x5c] sm:$0xf]
  %v55 = vld [vmem:[%s1 + $0x60] sm:$0xf]
  %v56 = vld [vmem:[%s1 + $0x64] sm:$0xf]
  %v57 = vld [vmem:[%s1 + $0x68] sm:$0xf]
  %v58 = vld [vmem:[%s1 + $0x6c] sm:$0xf]
  %v59 = vld [vmem:[%s1 + $0x70] sm:$0xf]
  %v60 = vld [vmem:[%s1 + $0x74] sm:$0xf]
  %v61 = vld [vmem:[%s1 + $0x78] sm:$0xf]
  %v62 = vld [vmem:[%s1 + $0x7c] sm:$0xf]
  %v67 = vunpack.c.l.b16 %v27
  %v68 = vunpack.c.h.b16 %v27
  %v69 = vunpack.c.l.b16 %v28
  %v70 = vunpack.c.h.b16 %v28
  %v71 = vunpack.c.l.b16 %v29
  %v72 = vunpack.c.h.b16 %v29
  %v73 = vunpack.c.l.b16 %v30
  %v74 = vunpack.c.h.b16 %v30
  %v75 = vpack.c.b16 %v69, %v67
  %v76 = vpack.c.b16 %v70, %v68
  %v77 = vpack.c.b16 %v73, %v71
  %v78 = vpack.c.b16 %v74, %v72
  %v115 = vunpack.c.l.b16 %v31
  %v116 = vunpack.c.l.b16 %v32
  %v117 = vunpack.c.l.b16 %v33
  %v118 = vunpack.c.l.b16 %v34
  %v119 = vunpack.c.l.b16 %v35
  %v120 = vunpack.c.l.b16 %v36
  %v121 = vunpack.c.l.b16 %v37
  %v122 = vunpack.c.l.b16 %v38
  %v123 = vunpack.c.l.b16 %v39
  %v124 = vunpack.c.l.b16 %v40
  %v125 = vunpack.c.l.b16 %v41
  %v126 = vunpack.c.l.b16 %v42
  %v127 = vunpack.c.l.b16 %v43
  %v128 = vunpack.c.l.b16 %v44
  %v129 = vunpack.c.l.b16 %v45
  %v130 = vunpack.c.l.b16 %v46
  %v131 = vunpack.c.l.b16 %v47
  %v132 = vunpack.c.l.b16 %v48
  %v133 = vunpack.c.l.b16 %v49
  %v134 = vunpack.c.l.b16 %v50
  %v135 = vunpack.c.l.b16 %v51
  %v136 = vunpack.c.l.b16 %v52
  %v137 = vunpack.c.l.b16 %v53
  %v138 = vunpack.c.l.b16 %v54
  %v139 = vunpack.c.l.b16 %v55
  %v140 = vunpack.c.l.b16 %v56
  %v141 = vunpack.c.l.b16 %v57
  %v142 = vunpack.c.l.b16 %v58
  %v143 = vunpack.c.l.b16 %v59
  %v144 = vunpack.c.l.b16 %v60
  %v145 = vunpack.c.l.b16 %v61
  %v146 = vunpack.c.l.b16 %v62
  %v147 = vpack.c.b16 %v116, %v115
  %v148 = vpack.c.b16 %v118, %v117
  %v149 = vpack.c.b16 %v120, %v119
  %v150 = vpack.c.b16 %v122, %v121
  %v151 = vpack.c.b16 %v124, %v123
  %v152 = vpack.c.b16 %v126, %v125
  %v153 = vpack.c.b16 %v128, %v127
  %v154 = vpack.c.b16 %v130, %v129
  %v155 = vpack.c.b16 %v132, %v131
  %v156 = vpack.c.b16 %v134, %v133
  %v157 = vpack.c.b16 %v136, %v135
  %v158 = vpack.c.b16 %v138, %v137
  %v159 = vpack.c.b16 %v140, %v139
  %v160 = vpack.c.b16 %v142, %v141
  %v161 = vpack.c.b16 %v144, %v143
  %v162 = vpack.c.b16 %v146, %v145
  %179 = vmatprep.subr.bf16.mxu0 0
  %180 = vmatpush1.bf16.msra.mxu0 %v147
  %181 = vmatprep.subr.bf16.mxu0 0
  %182 = vmatpush1.bf16.msra.mxu0 %v148
  %183 = vmatprep.subr.bf16.mxu0 0
  %184 = vmatpush1.bf16.msra.mxu0 %v149
  %185 = vmatprep.subr.bf16.mxu0 0
  %186 = vmatpush1.bf16.msra.mxu0 %v150
  %187 = vmatprep.subr.bf16.mxu0 0
  %188 = vmatpush1.bf16.msra.mxu0 %v151
  %189 = vmatprep.subr.bf16.mxu0 0
  %190 = vmatpush1.bf16.msra.mxu0 %v152
  %191 = vmatprep.subr.bf16.mxu0 0
  %192 = vmatpush1.bf16.msra.mxu0 %v153
  %193 = vmatprep.subr.bf16.mxu0 0
  %194 = vmatpush1.bf16.msra.mxu0 %v154
  %195 = vmatprep.subr.bf16.mxu0 0
  %196 = vmatpush1.bf16.msra.mxu0 %v155
  %197 = vmatprep.subr.bf16.mxu0 0
  %198 = vmatpush1.bf16.msra.mxu0 %v156
  %199 = vmatprep.subr.bf16.mxu0 0
  %200 = vmatpush1.bf16.msra.mxu0 %v157
  %201 = vmatprep.subr.bf16.mxu0 0
  %202 = vmatpush1.bf16.msra.mxu0 %v158
  %203 = vmatprep.subr.bf16.mxu0 0
  %204 = vmatpush1.bf16.msra.mxu0 %v159
  %205 = vmatprep.subr.bf16.mxu0 0
  %206 = vmatpush1.bf16.msra.mxu0 %v160
  %207 = vmatprep.subr.bf16.mxu0 0
  %208 = vmatpush1.bf16.msra.mxu0 %v161
  %209 = vmatprep.subr.bf16.mxu0 0
  %210 = vmatpush1.bf16.msra.mxu0 %v162
  %211 = vmatprep.mubr.bf16.mxu0 %v76
  %212 = vmatmul.mubr.bf16.gmra.mrb[0].mxu0 %v75
  %v213 = vpop.f32.mrb[0].mxu0
  %v214 = vadd.f32 0.0, %v213
  %v215 = vpop.f32.mrb[0].mxu0
  %v216 = vpop.f32.mrb[0].mxu0
  %v217 = vadd.f32 0.0, %v216
  %v218 = vpop.f32.mrb[0].mxu0
  %219 = vmatprep.mubr.bf16.mxu0 %v78
  %220 = vmatmul.mubr.bf16.gmra.mrb[0].mxu0 %v77
  %v221 = vpop.f32.mrb[0].mxu0
  %v222 = vadd.f32 0.0, %v221
  %v223 = vpop.f32.mrb[0].mxu0
  %v224 = vpop.f32.mrb[0].mxu0
  %v225 = vadd.f32 0.0, %v224
  %v226 = vpop.f32.mrb[0].mxu0
  %227 = vdwg.mxu0
  %v228 = vld [vmem:[%s2] sm:$0x1]
  %v230 = vlaneseq
  %v231 = vshrl.u32 %v230, 7
  %v232 = vsub.s32 0, %v231
  %v233 = vrot.slane %v228, %v232
  %v235 = vmul.f32 %v214, %v233
  %v236 = vmul.f32 %v217, %v233
  %v237 = vmul.f32 %v222, %v233
  %v238 = vmul.f32 %v225, %v233
  %v239 = vld [vmem:[%s3] sm:$0x1]
  %v241 = vlaneseq
  %v242 = vshrl.u32 %v241, 7
  %v243 = vsub.s32 0, %v242
  %v244 = vrot.slane %v239, %v243
  %v246 = vadd.f32 %v235, %v244
  %v247 = vadd.f32 %v236, %v244
  %v248 = vadd.f32 %v237, %v244
  %v249 = vadd.f32 %v238, %v244
  %v250 = vsub.f32 0.0, %v246
  %v251 = vsub.f32 0.0, %v247
  %v252 = vsub.f32 0.0, %v248
  %v253 = vsub.f32 0.0, %v249
  %v254 = vmin.f32 %v250, 80.0
  %v255 = vmin.f32 %v251, 80.0
  %v256 = vmin.f32 %v252, 80.0
  %v257 = vmin.f32 %v253, 80.0
  %v258 = vmul.f32 %v254, 1.442695
  %v259 = vpow.pop %v258
  %v260 = vmul.f32 %v255, 1.442695
  %v261 = vpow.pop %v260
  %v262 = vmul.f32 %v256, 1.442695
  %v263 = vpow.pop %v262
  %v264 = vmul.f32 %v257, 1.442695
  %v265 = vpow.pop %v264
  %v266 = vadd.f32 %v259, 1.0
  %v267 = vadd.f32 %v261, 1.0
  %v268 = vadd.f32 %v263, 1.0
  %v269 = vadd.f32 %v265, 1.0
  %v270 = vrcp.pop %v266
  %v271 = vrcp.pop %v267
  %v272 = vrcp.pop %v268
  %v273 = vrcp.pop %v269
  %v274 = vmul.f32 %v246, %v270
  %v275 = vmul.f32 %v247, %v271
  %v276 = vmul.f32 %v248, %v272
  %v277 = vmul.f32 %v249, %v273
  %v278 = vpack.c.bf16 %v275, %v274
  %v279 = vpack.c.bf16 %v277, %v276
  %v280 = vld [vmem:[%s4] sm:$0xf]
  %v281 = vld [vmem:[%s4 + $0x4] sm:$0xf]
  %v282 = vld [vmem:[%s4 + $0x8] sm:$0xf]
  %v283 = vld [vmem:[%s4 + $0xc] sm:$0xf]
  %v284 = vld [vmem:[%s4 + $0x10] sm:$0xf]
  %v285 = vld [vmem:[%s4 + $0x14] sm:$0xf]
  %v286 = vld [vmem:[%s4 + $0x18] sm:$0xf]
  %v287 = vld [vmem:[%s4 + $0x1c] sm:$0xf]
  %v288 = vld [vmem:[%s4 + $0x20] sm:$0xf]
  %v289 = vld [vmem:[%s4 + $0x24] sm:$0xf]
  %v290 = vld [vmem:[%s4 + $0x28] sm:$0xf]
  %v291 = vld [vmem:[%s4 + $0x2c] sm:$0xf]
  %v292 = vld [vmem:[%s4 + $0x30] sm:$0xf]
  %v293 = vld [vmem:[%s4 + $0x34] sm:$0xf]
  %v294 = vld [vmem:[%s4 + $0x38] sm:$0xf]
  %v295 = vld [vmem:[%s4 + $0x3c] sm:$0xf]
  %v312 = vunpack.c.l.b16 %v280
  %v313 = vunpack.c.l.b16 %v281
  %v314 = vunpack.c.l.b16 %v282
  %v315 = vunpack.c.l.b16 %v283
  %v316 = vunpack.c.l.b16 %v284
  %v317 = vunpack.c.l.b16 %v285
  %v318 = vunpack.c.l.b16 %v286
  %v319 = vunpack.c.l.b16 %v287
  %v320 = vunpack.c.l.b16 %v288
  %v321 = vunpack.c.l.b16 %v289
  %v322 = vunpack.c.l.b16 %v290
  %v323 = vunpack.c.l.b16 %v291
  %v324 = vunpack.c.l.b16 %v292
  %v325 = vunpack.c.l.b16 %v293
  %v326 = vunpack.c.l.b16 %v294
  %v327 = vunpack.c.l.b16 %v295
  %v328 = vpack.c.b16 %v313, %v312
  %v329 = vpack.c.b16 %v315, %v314
  %v330 = vpack.c.b16 %v317, %v316
  %v331 = vpack.c.b16 %v319, %v318
  %v332 = vpack.c.b16 %v321, %v320
  %v333 = vpack.c.b16 %v323, %v322
  %v334 = vpack.c.b16 %v325, %v324
  %v335 = vpack.c.b16 %v327, %v326
  %344 = vmatprep.subr.bf16.mxu0 0
  %345 = vmatpush1.bf16.msra.mxu0 %v328
  %346 = vmatprep.subr.bf16.mxu0 0
  %347 = vmatpush1.bf16.msra.mxu0 %v329
  %348 = vmatprep.subr.bf16.mxu0 0
  %349 = vmatpush1.bf16.msra.mxu0 %v330
  %350 = vmatprep.subr.bf16.mxu0 0
  %351 = vmatpush1.bf16.msra.mxu0 %v331
  %352 = vmatprep.subr.bf16.mxu0 0
  %353 = vmatpush1.bf16.msra.mxu0 %v332
  %354 = vmatprep.subr.bf16.mxu0 0
  %355 = vmatpush1.bf16.msra.mxu0 %v333
  %356 = vmatprep.subr.bf16.mxu0 0
  %357 = vmatpush1.bf16.msra.mxu0 %v334
  %358 = vmatprep.subr.bf16.mxu0 0
  %359 = vmatpush1.bf16.msra.mxu0 %v335
  %360 = vmatprep.subr.bf16.mxu0 0
  %361 = vmatpush1.bf16.msra.mxu0 0
  %362 = vmatprep.subr.bf16.mxu0 0
  %363 = vmatpush1.bf16.msra.mxu0 0
  %364 = vmatprep.subr.bf16.mxu0 0
  %365 = vmatpush1.bf16.msra.mxu0 0
  %366 = vmatprep.subr.bf16.mxu0 0
  %367 = vmatpush1.bf16.msra.mxu0 0
  %368 = vmatprep.subr.bf16.mxu0 0
  %369 = vmatpush1.bf16.msra.mxu0 0
  %370 = vmatprep.subr.bf16.mxu0 0
  %371 = vmatpush1.bf16.msra.mxu0 0
  %372 = vmatprep.subr.bf16.mxu0 0
  %373 = vmatpush1.bf16.msra.mxu0 0
  %374 = vmatprep.subr.bf16.mxu0 0
  %375 = vmatpush1.bf16.msra.mxu0 0
  %376 = vmatprep.mubr.bf16.mxu0 0
  %377 = vmatmul.mubr.bf16.gmra.mrb[0].mxu0 %v278
  %v378 = vpop.f32.mrb[0].mxu0
  %v379 = vadd.f32 0.0, %v378
  %v380 = vpop.f32.mrb[0].mxu0
  %v381 = vpop.f32.mrb[0].mxu0
  %v382 = vadd.f32 0.0, %v381
  %v383 = vpop.f32.mrb[0].mxu0
  %384 = vmatprep.mubr.bf16.mxu0 0
  %385 = vmatmul.mubr.bf16.gmra.mrb[0].mxu0 %v279
  %v386 = vpop.f32.mrb[0].mxu0
  %v387 = vadd.f32 0.0, %v386
  %v388 = vpop.f32.mrb[0].mxu0
  %v389 = vpop.f32.mrb[0].mxu0
  %v390 = vadd.f32 0.0, %v389
  %v391 = vpop.f32.mrb[0].mxu0
  %392 = vdwg.mxu0
  %v393 = vld [vmem:[%s5] sm:$0x1]
  %v395 = vlaneseq
  %v396 = vshrl.u32 %v395, 7
  %v397 = vsub.s32 0, %v396
  %v398 = vrot.slane %v393, %v397
  %v400 = vmul.f32 %v379, %v398
  %v401 = vmul.f32 %v382, %v398
  %v402 = vmul.f32 %v387, %v398
  %v403 = vmul.f32 %v390, %v398
  %v404 = vld [vmem:[%s6] sm:$0x1]
  %v406 = vlaneseq
  %v407 = vshrl.u32 %v406, 7
  %v408 = vsub.s32 0, %v407
  %v409 = vrot.slane %v404, %v408
  %v411 = vadd.f32 %v400, %v409
  %v412 = vadd.f32 %v401, %v409
  %v413 = vadd.f32 %v402, %v409
  %v414 = vadd.f32 %v403, %v409
  %v415 = vpack.c.bf16 %v412, %v411
  %v416 = vpack.c.bf16 %v414, %v413
  %v419 = vunpack.c.l.b16 %v415
  %v420 = vunpack.c.h.b16 %v415
  %v421 = vunpack.c.l.b16 %v416
  %v422 = vunpack.c.h.b16 %v416
  %v423 = vpack.c.b16 %v419, %v419
  %v424 = vpack.c.b16 %v420, %v420
  %v425 = vpack.c.b16 %v421, %v421
  %v426 = vpack.c.b16 %v422, %v422
  %431 = vst [vmem:[%s7] sm:$0xf] %v423
  %432 = vst [vmem:[%s7 + $0x4] sm:$0xf] %v424
  %433 = vst [vmem:[%s7 + $0x8] sm:$0xf] %v425
  %434 = vst [vmem:[%s7 + $0xc] sm:$0xf] %v426
  // Predicated region
  $region30: #{_lambda_.8} parent=0 // pred_check
    _
  $region31: #{_lambda_.8} parent=0 // pred_check_branch
    %436 = sbr.rel (0) target = $region33
  $region32: #{_lambda_.8} parent=0 // pred_region
    _
  $region33: #{_lambda_.8} parent=0 // pred_fallthru
    _
  // Predicated region
  $region34: #{_lambda_.8} parent=0 // pred_check
    _
  $region35: #{_lambda_.8} parent=0 // pred_check_branch
    %438 = sbr.rel (0) target = $region37
  $region36: #{_lambda_.8} parent=0 // pred_region
    _
  $region37: #{_lambda_.8} parent=0 // pred_fallthru
    _

// kernel: _lambda_.10
$region0: #{_lambda_.10}
  #allocation0 [shape = 'u32[]', space=smem, size = 0x4, offset = 0x4, fixed_abs, tag = 'smem constant byte address 0x4 - core index']
  #allocation1 [shape = 'u32[144,128]{1,0:T(1,128)}', space=vmem, size = 0x12000, scoped, tag = 'internal scratch']
  %s0 = inlined_call_operand.vmem [shape: bf16[32,128], index: 0, kind: input, shape index: {}]
  %s1 = inlined_call_operand.vmem [shape: bf16[128,128], index: 1, kind: input, shape index: {}]
  %s2 = inlined_call_operand.vmem [shape: f32[1,128], index: 2, kind: input, shape index: {}]
  %s3 = inlined_call_operand.vmem [shape: f32[1,128], index: 3, kind: input, shape index: {}]
  %s4 = inlined_call_operand.vmem [shape: bf16[32,128], index: 4, kind: output, shape index: {0}]
  %s5 = inlined_call_operand.vmem [shape: bf16[32,128], index: 5, kind: output, shape index: {1}]
  %s6 = inlined_call_operand.vmem [shape: bf16[32,128], index: 6, kind: output, shape index: {2}]
  %7 = xla_tuple %s4, %s5, %s6
  %s8 = sld [smem:[#allocation0]]
  $region42: #{_lambda_.10} parent=0
    _
  %s10 = ssub.s32 1, %s8
  %s11 = scalar_select 0, %s10, %s8
  // Predicated region
  $region2: #{_lambda_.10} parent=0 // pred_check
    _
  $region3: #{_lambda_.10} parent=0 // pred_check_branch
    %13 = sbr.rel (0) target = $region5
  $region4: #{_lambda_.10} parent=0 // pred_region
    _
  $region5: #{_lambda_.10} parent=0 // pred_fallthru
    _
  // Predicated region
  $region6: #{_lambda_.10} parent=0 // pred_check
    _
  $region7: #{_lambda_.10} parent=0 // pred_check_branch
    %15 = sbr.rel (0) target = $region9
  $region8: #{_lambda_.10} parent=0 // pred_region
    _
  $region9: #{_lambda_.10} parent=0 // pred_fallthru
    _
  // Predicated region
  $region10: #{_lambda_.10} parent=0 // pred_check
    _
  $region11: #{_lambda_.10} parent=0 // pred_check_branch
    %17 = sbr.rel (0) target = $region13
  $region12: #{_lambda_.10} parent=0 // pred_region
    _
  $region13: #{_lambda_.10} parent=0 // pred_fallthru
    _
  // Predicated region
  $region14: #{_lambda_.10} parent=0 // pred_check
    _
  $region15: #{_lambda_.10} parent=0 // pred_check_branch
    %19 = sbr.rel (0) target = $region17
  $region16: #{_lambda_.10} parent=0 // pred_region
    _
  $region17: #{_lambda_.10} parent=0 // pred_fallthru
    _
  %v21 = vld [vmem:[%s0] sm:$0xf]
  %v22 = vld [vmem:[%s0 + $0x4] sm:$0xf]
  %v23 = vld [vmem:[%s0 + $0x8] sm:$0xf]
  %v24 = vld [vmem:[%s0 + $0xc] sm:$0xf]
  %v25 = vld [vmem:[%s1] sm:$0xf]
  %v26 = vld [vmem:[%s1 + $0x4] sm:$0xf]
  %v27 = vld [vmem:[%s1 + $0x8] sm:$0xf]
  %v28 = vld [vmem:[%s1 + $0xc] sm:$0xf]
  %v29 = vld [vmem:[%s1 + $0x10] sm:$0xf]
  %v30 = vld [vmem:[%s1 + $0x14] sm:$0xf]
  %v31 = vld [vmem:[%s1 + $0x18] sm:$0xf]
  %v32 = vld [vmem:[%s1 + $0x1c] sm:$0xf]
  %v33 = vld [vmem:[%s1 + $0x20] sm:$0xf]
  %v34 = vld [vmem:[%s1 + $0x24] sm:$0xf]
  %v35 = vld [vmem:[%s1 + $0x28] sm:$0xf]
  %v36 = vld [vmem:[%s1 + $0x2c] sm:$0xf]
  %v37 = vld [vmem:[%s1 + $0x30] sm:$0xf]
  %v38 = vld [vmem:[%s1 + $0x34] sm:$0xf]
  %v39 = vld [vmem:[%s1 + $0x38] sm:$0xf]
  %v40 = vld [vmem:[%s1 + $0x3c] sm:$0xf]
  %v45 = vunpack.c.l.b16 %v21
  %v46 = vunpack.c.l.b16 %v22
  %v47 = vunpack.c.l.b16 %v23
  %v48 = vunpack.c.l.b16 %v24
  %v49 = vpack.c.b16 %v46, %v45
  %v50 = vpack.c.b16 %v48, %v47
  %v69 = vunpack.c.l.b16 %v25
  %v70 = vunpack.c.l.b16 %v26
  %v71 = vunpack.c.l.b16 %v27
  %v72 = vunpack.c.l.b16 %v28
  %v73 = vunpack.c.l.b16 %v29
  %v74 = vunpack.c.l.b16 %v30
  %v75 = vunpack.c.l.b16 %v31
  %v76 = vunpack.c.l.b16 %v32
  %v77 = vunpack.c.l.b16 %v33
  %v78 = vunpack.c.l.b16 %v34
  %v79 = vunpack.c.l.b16 %v35
  %v80 = vunpack.c.l.b16 %v36
  %v81 = vunpack.c.l.b16 %v37
  %v82 = vunpack.c.l.b16 %v38
  %v83 = vunpack.c.l.b16 %v39
  %v84 = vunpack.c.l.b16 %v40
  %v85 = vpack.c.b16 %v70, %v69
  %v86 = vpack.c.b16 %v72, %v71
  %v87 = vpack.c.b16 %v74, %v73
  %v88 = vpack.c.b16 %v76, %v75
  %v89 = vpack.c.b16 %v78, %v77
  %v90 = vpack.c.b16 %v80, %v79
  %v91 = vpack.c.b16 %v82, %v81
  %v92 = vpack.c.b16 %v84, %v83
  %101 = vmatprep.subr.bf16.mxu0 0
  %102 = vmatpush1.bf16.msra.mxu0 %v85
  %103 = vmatprep.subr.bf16.mxu0 0
  %104 = vmatpush1.bf16.msra.mxu0 %v86
  %105 = vmatprep.subr.bf16.mxu0 0
  %106 = vmatpush1.bf16.msra.mxu0 %v87
  %107 = vmatprep.subr.bf16.mxu0 0
  %108 = vmatpush1.bf16.msra.mxu0 %v88
  %109 = vmatprep.subr.bf16.mxu0 0
  %110 = vmatpush1.bf16.msra.mxu0 %v89
  %111 = vmatprep.subr.bf16.mxu0 0
  %112 = vmatpush1.bf16.msra.mxu0 %v90
  %113 = vmatprep.subr.bf16.mxu0 0
  %114 = vmatpush1.bf16.msra.mxu0 %v91
  %115 = vmatprep.subr.bf16.mxu0 0
  %116 = vmatpush1.bf16.msra.mxu0 %v92
  %117 = vmatprep.subr.bf16.mxu0 0
  %118 = vmatpush1.bf16.msra.mxu0 0
  %119 = vmatprep.subr.bf16.mxu0 0
  %120 = vmatpush1.bf16.msra.mxu0 0
  %121 = vmatprep.subr.bf16.mxu0 0
  %122 = vmatpush1.bf16.msra.mxu0 0
  %123 = vmatprep.subr.bf16.mxu0 0
  %124 = vmatpush1.bf16.msra.mxu0 0
  %125 = vmatprep.subr.bf16.mxu0 0
  %126 = vmatpush1.bf16.msra.mxu0 0
  %127 = vmatprep.subr.bf16.mxu0 0
  %128 = vmatpush1.bf16.msra.mxu0 0
  %129 = vmatprep.subr.bf16.mxu0 0
  %130 = vmatpush1.bf16.msra.mxu0 0
  %131 = vmatprep.subr.bf16.mxu0 0
  %132 = vmatpush1.bf16.msra.mxu0 0
  %133 = vmatprep.mubr.bf16.mxu0 0
  %134 = vmatmul.mubr.bf16.gmra.mrb[0].mxu0 %v49
  %v135 = vpop.f32.mrb[0].mxu0
  %v136 = vadd.f32 0.0, %v135
  %v137 = vpop.f32.mrb[0].mxu0
  %v138 = vpop.f32.mrb[0].mxu0
  %v139 = vadd.f32 0.0, %v138
  %v140 = vpop.f32.mrb[0].mxu0
  %141 = vmatprep.mubr.bf16.mxu0 0
  %142 = vmatmul.mubr.bf16.gmra.mrb[0].mxu0 %v50
  %v143 = vpop.f32.mrb[0].mxu0
  %v144 = vadd.f32 0.0, %v143
  %v145 = vpop.f32.mrb[0].mxu0
  %v146 = vpop.f32.mrb[0].mxu0
  %v147 = vadd.f32 0.0, %v146
  %v148 = vpop.f32.mrb[0].mxu0
  %149 = vdwg.mxu0
  %v150 = vpack.c.bf16 %v139, %v136
  %v151 = vpack.c.bf16 %v147, %v144
  %v154 = vunpack.c.l.b16 %v150
  %v155 = vunpack.c.h.b16 %v150
  %v156 = vunpack.c.l.b16 %v151
  %v157 = vunpack.c.h.b16 %v151
  %v158 = vpack.c.b16 %v154, %v154
  %v159 = vpack.c.b16 %v155, %v155
  %v160 = vpack.c.b16 %v156, %v156
  %v161 = vpack.c.b16 %v157, %v157
  %166 = vst [vmem:[%s4] sm:$0xf] %v158
  %167 = vst [vmem:[%s4 + $0x4] sm:$0xf] %v159
  %168 = vst [vmem:[%s4 + $0x8] sm:$0xf] %v160
  %169 = vst [vmem:[%s4 + $0xc] sm:$0xf] %v161
  %v170 = vld [vmem:[%s2] sm:$0x1]
  %v172 = vlaneseq
  %v173 = vshrl.u32 %v172, 7
  %v174 = vsub.s32 0, %v173
  %v175 = vrot.slane %v170, %v174
  %v177 = vmul.f32 %v136, %v175
  %v178 = vmul.f32 %v139, %v175
  %v179 = vmul.f32 %v144, %v175
  %v180 = vmul.f32 %v147, %v175
  %v181 = vld [vmem:[%s3] sm:$0x1]
  %v183 = vlaneseq
  %v184 = vshrl.u32 %v183, 7
  %v185 = vsub.s32 0, %v184
  %v186 = vrot.slane %v181, %v185
  %v188 = vadd.f32 %v177, %v186
  %v189 = vadd.f32 %v178, %v186
  %v190 = vadd.f32 %v179, %v186
  %v191 = vadd.f32 %v180, %v186
  %v192 = vpack.c.bf16 %v189, %v188
  %v193 = vpack.c.bf16 %v191, %v190
  %v196 = vunpack.c.l.b16 %v192
  %v197 = vunpack.c.h.b16 %v192
  %v198 = vunpack.c.l.b16 %v193
  %v199 = vunpack.c.h.b16 %v193
  %v200 = vpack.c.b16 %v196, %v196
  %v201 = vpack.c.b16 %v197, %v197
  %v202 = vpack.c.b16 %v198, %v198
  %v203 = vpack.c.b16 %v199, %v199
  %208 = vst [vmem:[%s5] sm:$0xf] %v200
  %209 = vst [vmem:[%s5 + $0x4] sm:$0xf] %v201
  %210 = vst [vmem:[%s5 + $0x8] sm:$0xf] %v202
  %211 = vst [vmem:[%s5 + $0xc] sm:$0xf] %v203
  %v212 = vsub.f32 0.0, %v188
  %v213 = vsub.f32 0.0, %v189
  %v214 = vsub.f32 0.0, %v190
  %v215 = vsub.f32 0.0, %v191
  %v216 = vmin.f32 %v212, 80.0
  %v217 = vmin.f32 %v213, 80.0
  %v218 = vmin.f32 %v214, 80.0
  %v219 = vmin.f32 %v215, 80.0
  %v220 = vmul.f32 %v216, 1.442695
  %v221 = vpow.pop %v220
  %v222 = vmul.f32 %v217, 1.442695
  %v223 = vpow.pop %v222
  %v224 = vmul.f32 %v218, 1.442695
  %v225 = vpow.pop %v224
  %v226 = vmul.f32 %v219, 1.442695
  %v227 = vpow.pop %v226
  %v228 = vadd.f32 %v221, 1.0
  %v229 = vadd.f32 %v223, 1.0
  %v230 = vadd.f32 %v225, 1.0
  %v231 = vadd.f32 %v227, 1.0
  %v232 = vrcp.pop %v228
  %v233 = vrcp.pop %v229
  %v234 = vrcp.pop %v230
  %v235 = vrcp.pop %v231
  %v236 = vmul.f32 %v188, %v232
  %v237 = vmul.f32 %v189, %v233
  %v238 = vmul.f32 %v190, %v234
  %v239 = vmul.f32 %v191, %v235
  %v240 = vpack.c.bf16 %v237, %v236
  %v241 = vpack.c.bf16 %v239, %v238
  %v244 = vunpack.c.l.b16 %v240
  %v245 = vunpack.c.h.b16 %v240
  %v246 = vunpack.c.l.b16 %v241
  %v247 = vunpack.c.h.b16 %v241
  %v248 = vpack.c.b16 %v244, %v244
  %v249 = vpack.c.b16 %v245, %v245
  %v250 = vpack.c.b16 %v246, %v246
  %v251 = vpack.c.b16 %v247, %v247
  %256 = vst [vmem:[%s6] sm:$0xf] %v248
  %257 = vst [vmem:[%s6 + $0x4] sm:$0xf] %v249
  %258 = vst [vmem:[%s6 + $0x8] sm:$0xf] %v250
  %259 = vst [vmem:[%s6 + $0xc] sm:$0xf] %v251
  // Predicated region
  $region18: #{_lambda_.10} parent=0 // pred_check
    _
  $region19: #{_lambda_.10} parent=0 // pred_check_branch
    %261 = sbr.rel (0) target = $region21
  $region20: #{_lambda_.10} parent=0 // pred_region
    _
  $region21: #{_lambda_.10} parent=0 // pred_fallthru
    _
  // Predicated region
  $region22: #{_lambda_.10} parent=0 // pred_check
    _
  $region23: #{_lambda_.10} parent=0 // pred_check_branch
    %263 = sbr.rel (0) target = $region25
  $region24: #{_lambda_.10} parent=0 // pred_region
    _
  $region25: #{_lambda_.10} parent=0 // pred_fallthru
    _
  // Predicated region
  $region26: #{_lambda_.10} parent=0 // pred_check
    _
  $region27: #{_lambda_.10} parent=0 // pred_check_branch
    %265 = sbr.rel (0) target = $region29
  $region28: #{_lambda_.10} parent=0 // pred_region
    _
  $region29: #{_lambda_.10} parent=0 // pred_fallthru
    _
  // Predicated region
  $region30: #{_lambda_.10} parent=0 // pred_check
    _
  $region31: #{_lambda_.10} parent=0 // pred_check_branch
    %267 = sbr.rel (0) target = $region33
  $region32: #{_lambda_.10} parent=0 // pred_region
    _
  $region33: #{_lambda_.10} parent=0 // pred_fallthru
    _
  // Predicated region
  $region34: #{_lambda_.10} parent=0 // pred_check
    _
  $region35: #{_lambda_.10} parent=0 // pred_check_branch
    %269 = sbr.rel (0) target = $region37
  $region36: #{_lambda_.10} parent=0 // pred_region
    _
  $region37: #{_lambda_.10} parent=0 // pred_fallthru
    _
  // Predicated region
  $region38: #{_lambda_.10} parent=0 // pred_check
    _
  $region39: #{_lambda_.10} parent=0 // pred_check_branch
    %271 = sbr.rel (0) target = $region41
  $region40: #{_lambda_.10} parent=0 // pred_region
    _
  $region41: #{_lambda_.10} parent=0 // pred_fallthru
    _

// kernel: _lambda_.11
$region0: #{_lambda_.11}
  #allocation0 [shape = 'u32[]', space=smem, size = 0x4, offset = 0x4, fixed_abs, tag = 'smem constant byte address 0x4 - core index']
  #allocation1 [shape = 'u32[144,128]{1,0:T(1,128)}', space=vmem, size = 0x12000, scoped, tag = 'internal scratch']
  %s0 = inlined_call_operand.vmem [shape: bf16[2,16,128], index: 0, kind: input, shape index: {}]
  %s1 = inlined_call_operand.vmem [shape: bf16[128,128], index: 1, kind: input, shape index: {}]
  %s2 = inlined_call_operand.vmem [shape: f32[1,128], index: 2, kind: input, shape index: {}]
  %s3 = inlined_call_operand.hbm [shape: f32[2,128], index: 3, kind: output, shape index: {0}]
  %s4 = inlined_call_operand.hbm [shape: f32[2,128], index: 4, kind: output, shape index: {1}]
  %5 = xla_tuple %s3, %s4
  %s6 = sld [smem:[#allocation0]]
  $region38: #{_lambda_.11} parent=0
    _
  %s8 = ssub.s32 1, %s6
  %s9 = scalar_select 0, %s8, %s6
  $region1: #{_lambda_.11} parent=0
    #allocation2 [shape = 'u8[1024]{0}', space=vmem, size = 0x400, scoped, tag = 'output window, operand 0, single buffered']
    #allocation3 [shape = 's32[1]{0}', space=sflag, size = 0x4, scoped, tag = 'scoped memory for _lambda_.11']
    #allocation4 [shape = 'u8[1024]{0}', space=vmem, size = 0x400, scoped, tag = 'output window, operand 1, single buffered']
    #allocation5 [shape = 's32[1]{0}', space=sflag, size = 0x4, scoped, tag = 'scoped memory for _lambda_.11']
    %10 = vsyncpa [#allocation3], 0
    %11 = vsyncpa [#allocation5], 0
    // Predicated region
    $region2: #{_lambda_.11} parent=1 // pred_check
      _
    $region3: #{_lambda_.11} parent=1 // pred_check_branch
      %13 = sbr.rel (0) target = $region5
    $region4: #{_lambda_.11} parent=1 // pred_region
      _
    $region5: #{_lambda_.11} parent=1 // pred_fallthru
      _
    // Predicated region
    $region6: #{_lambda_.11} parent=1 // pred_check
      _
    $region7: #{_lambda_.11} parent=1 // pred_check_branch
      %15 = sbr.rel (0) target = $region9
    $region8: #{_lambda_.11} parent=1 // pred_region
      _
    $region9: #{_lambda_.11} parent=1 // pred_fallthru
      _
    // Predicated region
    $region10: #{_lambda_.11} parent=1 // pred_check
      _
    $region11: #{_lambda_.11} parent=1 // pred_check_branch
      %17 = sbr.rel (0) target = $region13
    $region12: #{_lambda_.11} parent=1 // pred_region
      _
    $region13: #{_lambda_.11} parent=1 // pred_fallthru
      _
    %p19 = scmp.eq.s32.totalorder 0, 0
    // Predicated region
    $region14: #{_lambda_.11} parent=1 // pred_check
      %p20 = pneg %p19
    $region15: #{_lambda_.11} parent=1 // pred_check_branch
      %22 = sbr.rel (%p20) target = $region17
    $region16: #{_lambda_.11} parent=1 // pred_region
      %23 = vst [vmem:[#allocation2] sm:$0x3] 0.0
    $region17: #{_lambda_.11} parent=1 // pred_fallthru
      _
    %v24 = vld [vmem:[#allocation2] sm:$0x3]
    %v25 = vld [vmem:[%s0] sm:$0xf]
    %v26 = vld [vmem:[%s0 + $0x4] sm:$0xf]
    %v27 = vld [vmem:[%s0 + $0x8] sm:$0xf]
    %v28 = vld [vmem:[%s0 + $0xc] sm:$0xf]
    %v29 = vunpack.c.l.bf16 %v25
    %v30 = vunpack.c.l.bf16 %v26
    %v31 = vunpack.c.l.bf16 %v27
    %v32 = vunpack.c.l.bf16 %v28
    %v33 = vadd.f32 %v29, %v30
    %v34 = vrot.slane %v33, 4
    %v35 = vadd.f32 %v33, %v34
    %v36 = vrot.slane %v35, 2
    %v37 = vadd.f32 %v35, %v36
    %v38 = vrot.slane %v37, 1
    %v39 = vadd.f32 %v37, %v38
    %v40 = vadd.f32 %v31, %v32
    %v41 = vrot.slane %v40, 4
    %v42 = vadd.f32 %v40, %v41
    %v43 = vrot.slane %v42, 2
    %v44 = vadd.f32 %v42, %v43
    %v45 = vrot.slane %v44, 1
    %v46 = vadd.f32 %v44, %v45
    %vm49 = vcmask 1041409
    %v50 = vsel %vm49, %v46, %v39
    %v52 = vadd.f32 %v24, %v50
    %53 = vst [vmem:[#allocation2] sm:$0x3] %v52
    // Predicated region
    $region18: #{_lambda_.11} parent=1 // pred_check
      %p54 = pneg %p19
    $region19: #{_lambda_.11} parent=1 // pred_check_branch
      %56 = sbr.rel (%p54) target = $region21
    $region20: #{_lambda_.11} parent=1 // pred_region
      %v57 = vld [vmem:[#allocation2] sm:$0x3]
      %v58 = vmul.f32 %v57, 0.0625
      %59 = vst [vmem:[#allocation2] sm:$0x3] %v58
      %v60 = vpack.c.bf16 %v58, %v58
      %v61 = vld [vmem:[%s1] sm:$0xf]
      %v62 = vld [vmem:[%s1 + $0x4] sm:$0xf]
      %v63 = vld [vmem:[%s1 + $0x8] sm:$0xf]
      %v64 = vld [vmem:[%s1 + $0xc] sm:$0xf]
      %v65 = vld [vmem:[%s1 + $0x10] sm:$0xf]
      %v66 = vld [vmem:[%s1 + $0x14] sm:$0xf]
      %v67 = vld [vmem:[%s1 + $0x18] sm:$0xf]
      %v68 = vld [vmem:[%s1 + $0x1c] sm:$0xf]
      %v69 = vld [vmem:[%s1 + $0x20] sm:$0xf]
      %v70 = vld [vmem:[%s1 + $0x24] sm:$0xf]
      %v71 = vld [vmem:[%s1 + $0x28] sm:$0xf]
      %v72 = vld [vmem:[%s1 + $0x2c] sm:$0xf]
      %v73 = vld [vmem:[%s1 + $0x30] sm:$0xf]
      %v74 = vld [vmem:[%s1 + $0x34] sm:$0xf]
      %v75 = vld [vmem:[%s1 + $0x38] sm:$0xf]
      %v76 = vld [vmem:[%s1 + $0x3c] sm:$0xf]
      %v77 = vld [vmem:[%s2] sm:$0x1]
      %v79 = vlaneseq
      %v80 = vshrl.u32 %v79, 7
      %v81 = vsub.s32 0, %v80
      %v82 = vrot.slane %v77, %v81
      %v100 = vunpack.c.l.b16 %v61
      %v101 = vunpack.c.l.b16 %v62
      %v102 = vunpack.c.l.b16 %v63
      %v103 = vunpack.c.l.b16 %v64
      %v104 = vunpack.c.l.b16 %v65
      %v105 = vunpack.c.l.b16 %v66
      %v106 = vunpack.c.l.b16 %v67
      %v107 = vunpack.c.l.b16 %v68
      %v108 = vunpack.c.l.b16 %v69
      %v109 = vunpack.c.l.b16 %v70
      %v110 = vunpack.c.l.b16 %v71
      %v111 = vunpack.c.l.b16 %v72
      %v112 = vunpack.c.l.b16 %v73
      %v113 = vunpack.c.l.b16 %v74
      %v114 = vunpack.c.l.b16 %v75
      %v115 = vunpack.c.l.b16 %v76
      %v116 = vpack.c.b16 %v101, %v100
      %v117 = vpack.c.b16 %v103, %v102
      %v118 = vpack.c.b16 %v105, %v104
      %v119 = vpack.c.b16 %v107, %v106
      %v120 = vpack.c.b16 %v109, %v108
      %v121 = vpack.c.b16 %v111, %v110
      %v122 = vpack.c.b16 %v113, %v112
      %v123 = vpack.c.b16 %v115, %v114
      %132 = vmatprep.subr.bf16.mxu0 0
      %133 = vmatpush1.bf16.msra.mxu0 %v116
      %134 = vmatprep.subr.bf16.mxu0 0
      %135 = vmatpush1.bf16.msra.mxu0 %v117
      %136 = vmatprep.subr.bf16.mxu0 0
      %137 = vmatpush1.bf16.msra.mxu0 %v118
      %138 = vmatprep.subr.bf16.mxu0 0
      %139 = vmatpush1.bf16.msra.mxu0 %v119
      %140 = vmatprep.subr.bf16.mxu0 0
      %141 = vmatpush1.bf16.msra.mxu0 %v120
      %142 = vmatprep.subr.bf16.mxu0 0
      %143 = vmatpush1.bf16.msra.mxu0 %v121
      %144 = vmatprep.subr.bf16.mxu0 0
      %145 = vmatpush1.bf16.msra.mxu0 %v122
      %146 = vmatprep.subr.bf16.mxu0 0
      %147 = vmatpush1.bf16.msra.mxu0 %v123
      %148 = vmatprep.subr.bf16.mxu0 0
      %149 = vmatpush1.bf16.msra.mxu0 0
      %150 = vmatprep.subr.bf16.mxu0 0
      %151 = vmatpush1.bf16.msra.mxu0 0
      %152 = vmatprep.subr.bf16.mxu0 0
      %153 = vmatpush1.bf16.msra.mxu0 0
      %154 = vmatprep.subr.bf16.mxu0 0
      %155 = vmatpush1.bf16.msra.mxu0 0
      %156 = vmatprep.subr.bf16.mxu0 0
      %157 = vmatpush1.bf16.msra.mxu0 0
      %158 = vmatprep.subr.bf16.mxu0 0
      %159 = vmatpush1.bf16.msra.mxu0 0
      %160 = vmatprep.subr.bf16.mxu0 0
      %161 = vmatpush1.bf16.msra.mxu0 0
      %162 = vmatprep.subr.bf16.mxu0 0
      %163 = vmatpush1.bf16.msra.mxu0 0
      %164 = vmatprep.mubr.bf16.mxu0 0
      %165 = vmatmul.mubr.bf16.gmra.mrb[0].mxu0 %v60
      %v166 = vpop.f32.mrb[0].mxu0
      %v167 = vadd.f32 %v82, %v166
      %v168 = vpop.f32.mrb[0].mxu0
      %v169 = vpop.f32.mrb[0].mxu0
      %v170 = vpop.f32.mrb[0].mxu0
      %171 = vdwg.mxu0
      %172 = vst [vmem:[#allocation4] sm:$0x3] %v167
    $region21: #{_lambda_.11} parent=1 // pred_fallthru
      _
    // Predicated region
    $region22: #{_lambda_.11} parent=1 // pred_check
      _
    $region23: #{_lambda_.11} parent=1 // pred_check_branch
      %174 = sbr.rel (0) target = $region25
    $region24: #{_lambda_.11} parent=1 // pred_region
      %s176 = ssub.s32 32, 32
      %177 = vsyncadd [#allocation3], %s176
      %s179 = sshll.u32 [#allocation2], 4
      %s180 = int_to_ptr.vmem [resolvable:$true] %s179
      %182 = dma.vmem_to_hbm [thread:$0]  %s180, 32, %s3, [#allocation3]
    $region25: #{_lambda_.11} parent=1 // pred_fallthru
      _
    // Predicated region
    $region26: #{_lambda_.11} parent=1 // pred_check
      _
    $region27: #{_lambda_.11} parent=1 // pred_check_branch
      %184 = sbr.rel (0) target = $region29
    $region28: #{_lambda_.11} parent=1 // pred_region
      %s186 = ssub.s32 32, 32
      %187 = vsyncadd [#allocation5], %s186
      %s189 = sshll.u32 [#allocation4], 4
      %s190 = int_to_ptr.vmem [resolvable:$true] %s189
      %192 = dma.vmem_to_hbm [thread:$0]  %s190, 32, %s4, [#allocation5]
    $region29: #{_lambda_.11} parent=1 // pred_fallthru
      _
    // Predicated region
    $region30: #{_lambda_.11} parent=1 // pred_check
      _
    $region31: #{_lambda_.11} parent=1 // pred_check_branch
      %194 = sbr.rel (0) target = $region33
    $region32: #{_lambda_.11} parent=1 // pred_region
      %195 = dma.done [#allocation3], 32
    $region33: #{_lambda_.11} parent=1 // pred_fallthru
      _
    // Predicated region
    $region34: #{_lambda_.11} parent=1 // pred_check
      _
    $region35: #{_lambda_.11} parent=1 // pred_check_branch
      %197 = sbr.rel (0) target = $region37
    $region36: #{_lambda_.11} parent=1 // pred_region
      %198 = dma.done [#allocation5], 32
    $region37: #{_lambda_.11} parent=1 // pred_fallthru
      _
    %199 = vsyncpa [#allocation3], 1
    %200 = vsyncpa [#allocation5], 1

</llo_original>
